<compile_context>
chip_gen: v6e
topology: v6e:2x2x1
jax: 0.10.0
libtpu: 0.0.40
codegen_flags: <defaults>
</compile_context>

<pallas_src>
import jax
import jax.numpy as jnp
import numpy as np
from jax import lax
from jax.experimental import pallas as pl
from jax.experimental.pallas import tpu as pltpu

BN_EPS = 1e-5


# ----------------------------------------------------------------------------
# Grid sizing: 1 big step on single-TC parts (v5e/v6e), 2 parallel steps on
# v7x (2 TensorCores/chip).  Extra grid steps are pure fixed overhead
# (~600 cycles each) at this problem size.
# ----------------------------------------------------------------------------
def _num_tensorcores():
    try:
        kind = (jax.devices()[0].device_kind or "").lower()
    except Exception:
        kind = ""
    return 2 if ("v7" in kind or "7x" in kind) else 1


def _choose_grid(n):
    tc = _num_tensorcores()
    return tc if (tc <= n and n % tc == 0) else 1


# ----------------------------------------------------------------------------
# Precomputed border masks (trace-time NumPy): validity of each of the 9
# depthwise taps under zero padding, per flattened (h, w) position.
# ----------------------------------------------------------------------------
def _border_masks(H, W, dil):
    hw = np.arange(H * W)
    hh, ww = hw // W, hw % W
    m = np.empty((9, H * W), np.float32)
    for kh in range(3):
        for kw in range(3):
            dh, dw = (kh - 1) * dil, (kw - 1) * dil
            ok = (hh + dh >= 0) & (hh + dh < H) & (ww + dw >= 0) & (ww + dw < W)
            m[kh * 3 + kw] = ok.astype(np.float32)
    return m


# ----------------------------------------------------------------------------
# Pack masks + all folded weights/biases into ONE (R, lanes) f32 operand
# (single DMA, single BlockSpec).  Each piece starts on an 8-row-aligned
# offset; columns are zero padded to `lanes`.
# ----------------------------------------------------------------------------
def _pack_params(masks, steps, skw, skb, lanes):
    pieces, layout, row = [], {}, 0

    def add(name, arr):
        nonlocal row
        arr = jnp.asarray(arr, jnp.float32)
        r, c = arr.shape
        pieces.append(jnp.pad(arr, ((0, 0), (0, lanes - c))))
        layout[name] = (row, r, c)
        row += r
        pad = (-row) % 8
        if pad:
            pieces.append(jnp.zeros((pad, lanes), jnp.float32))
            row += pad

    add("masks", masks)                      # (9, lanes)
    for i, st in enumerate(steps):
        add(f"dw{i}", st["dw"])              # (Cin, 9)
        add(f"pw{i}", st["w"])               # (Cout, Cin)  BN-folded
        add(f"pb{i}", st["b"])               # (Cout, 1)    BN-folded
    add("skw", skw)                          # (Cout, Cin)  BN-folded
    add("skb", skb)                          # (Cout, 1)
    return jnp.concatenate(pieces, axis=0), layout


# ----------------------------------------------------------------------------
# Fused Block kernel (lane-dense (C, NB*H*W) layout, one image-group per step)
# ----------------------------------------------------------------------------
def _make_block_kernel(layout, n_steps, masks_img, H, W, dil, lanes):
    # Static tap descriptors: flat lane offset + whether a border mask is needed.
    taps = []
    for kh in range(3):
        for kw in range(3):
            s = (kh - 1) * dil * W + (kw - 1) * dil
            needs_mask = not bool(np.all(masks_img[kh * 3 + kw] == 1.0))
            taps.append((s, needs_mask))
    mrow0 = layout["masks"][0]

    def kernel(x_ref, p_ref, out_ref):
        x = x_ref[...]                                     # (Cin, lanes)

        def piece(name):                                   # static ref slice -> load
            r0, nr, nc = layout[name]
            return p_ref[r0:r0 + nr, 0:nc]

        # Border masks: loaded once, shared by every SeparableConv step.
        masks = [p_ref[mrow0 + t:mrow0 + t + 1, :] if nm else None
                 for t, (_, nm) in enumerate(taps)]

        def pointwise(w, b, a):
            # 1x1 conv (+ folded BN) as Cin broadcast-FMAs on the VPU
            # (at C=4/8 an MXU matmul would be ~3% utilized):
            #   out[o, p] = sum_c w[o, c] * a[c, p] + b[o]
            acc = None
            for c in range(a.shape[0]):
                term = w[:, c:c + 1] * a[c:c + 1, :]       # (Cout,1)*(1,lanes)
                acc = term if acc is None else acc + term
            return acc + b                                 # bias (Cout, 1)

        def sepconv(y, wts, pw, pb):
            # ReLU -> depthwise 3x3 (stride 1, zero pad) -> pointwise 1x1,
            # with both BatchNorms pre-folded into (pw, pb).
            yr = jnp.maximum(y, 0.0)                       # zero pad is ReLU-invariant
            acc = None
            for t, (s, _) in enumerate(taps):
                if s == 0:
                    shifted = yr
                else:
                    # shifted[p] = yr[(p + s) % lanes]  == roll by -s (XLU rotate)
                    shifted = pltpu.roll(yr, shift=(-s) % lanes, axis=1)
                if masks[t] is not None:
                    shifted = shifted * masks[t]           # zero halo / image seams
                term = wts[:, t:t + 1] * shifted
                acc = term if acc is None else acc + term
            return pointwise(pw, pb, acc)

        h = x
        for i in range(n_steps):
            h = sepconv(h, piece(f"dw{i}"), piece(f"pw{i}"), piece(f"pb{i}"))

        # residual path: 1x1 skip conv (+ folded BN) on the raw block input
        out_ref[...] = h + pointwise(piece("skw"), piece("skb"), x)

    return kernel


# ----------------------------------------------------------------------------
# Parameter folding + wrapper
# ----------------------------------------------------------------------------
def _fold_block_params(params):
    """Fold inference-mode BatchNorms into the pointwise / skip 1x1 weights.

    Per step:  y = ((d*s1 + b1) @ pw) * s2 + b2
                 -> w_f[o,c] = s2[o]*pw[c,o]*s1[c]
                    b_f[o]   = s2[o]*sum_c pw[c,o]*b1[c] + b2[o]
    Skip:      skip = (x @ skw) * ss + sb -> skw_f[o,c] = ss[o]*skw[c,o], skb_f = sb
    """
    steps = []
    for st in params["steps"]:
        s1, b1 = st["s1"].reshape(-1), st["b1"].reshape(-1)
        s2, b2 = st["s2"].reshape(-1), st["b2"].reshape(-1)
        pw = st["pw"]                                      # (Cin, Cout)
        w_f = pw.T * s1[None, :] * s2[:, None]             # (Cout, Cin)
        b_f = s2 * jnp.sum(pw * b1[:, None], axis=0) + b2  # (Cout,)
        steps.append(dict(dw=st["dw"].T,                   # (Cin, 9)
                          w=w_f, b=b_f.reshape(-1, 1)))
    if params["skip"] is not None:
        sk = params["skip"]
        ss, sb = sk["s"].reshape(-1), sk["b"].reshape(-1)
        skw = sk["w"].T * ss[:, None]                      # (Cout, Cin)
        skb = sb.reshape(-1, 1)
    else:
        cout = steps[-1]["w"].shape[0]                     # identity skip (Cin == Cout)
        skw = jnp.eye(cout, dtype=jnp.float32)
        skb = jnp.zeros((cout, 1), jnp.float32)
    return steps, skw, skb


def block_forward(x_nchw, params, dilation=1):
    """Block.forward: (N, Cin, H, W) -> (N, Cout, H, W) in one fused kernel."""
    steps, skw, skb = _fold_block_params(params)
    N, Cin, H, W = x_nchw.shape
    HW = H * W
    Cout = skw.shape[0]

    # Preconditions of the shift+mask depthwise path (this Block config has
    # stride=1, is_last=False).
    # TODO(synk): stride!=1 / is_last Block variants (strided tail sepconv and
    # strided 1x1 skip) are not exercised by this synthetic configuration.
    assert dilation >= 1 and dilation < min(H, W)

    g = _choose_grid(N)            # 1 step on v5e/v6e, 2 parallel steps on v7x
    NB = N // g                    # images folded into the lane axis per step
    lanes = NB * HW
    assert lanes % 128 == 0, "lane-dense layout requires NB*H*W % 128 == 0"

    masks_img = _border_masks(H, W, dilation)                 # (9, HW) numpy
    packed, layout = _pack_params(np.tile(masks_img, (1, NB)),
                                  steps, skw, skb, lanes)

    # NCHW -> (g, C, NB*HW): batch folded into lanes (layout plumbing outside
    # the kernel); output stores stay full-width unmasked vst.
    x_g = (x_nchw.reshape(g, NB, Cin, HW)
           .transpose(0, 2, 1, 3)
           .reshape(g, Cin, lanes))

    out = pl.pallas_call(
        _make_block_kernel(layout, len(steps), masks_img, H, W, dilation, lanes),
        out_shape=jax.ShapeDtypeStruct((g, Cout, lanes), jnp.float32),
        grid=(g,),
        in_specs=[
            pl.BlockSpec((None, Cin, lanes), lambda i: (i, 0, 0)),
            pl.BlockSpec(packed.shape, lambda i: (0, 0)),     # ONE packed operand
        ],
        out_specs=pl.BlockSpec((None, Cout, lanes), lambda i: (i, 0, 0)),
        compiler_params=pltpu.CompilerParams(
            dimension_semantics=("parallel",)),               # v7x: 2 TCs split batch
    )(x_g, packed)

    return (out.reshape(g, Cout, NB, HW)
            .transpose(0, 2, 1, 3)
            .reshape(N, Cout, H, W))


# ----------------------------------------------------------------------------
# Deterministic parameter init (inference-mode BN folded to scale/bias)
# ----------------------------------------------------------------------------
def _fold_bn(kg, kb, c):
    gamma = 1.0 + 0.1 * jax.random.normal(kg, (c,), jnp.float32)
    beta = 0.1 * jax.random.normal(kb, (c,), jnp.float32)
    mean = 0.1 * jax.random.normal(jax.random.fold_in(kg, 1), (c,), jnp.float32)
    var = 0.5 + jax.random.uniform(jax.random.fold_in(kb, 1), (c,), jnp.float32)
    scale = gamma / jnp.sqrt(var + BN_EPS)
    bias = beta - mean * scale
    return scale.reshape(1, c), bias.reshape(1, c)


def init_block_params(key, in_channels, out_channels, reps):
    # grow_first=True, stride=1, start_with_relu=True, is_last=False
    step_chans = [(in_channels, out_channels)]
    step_chans += [(out_channels, out_channels)] * (reps - 1)

    params = {"steps": []}
    for cin, cout in step_chans:
        key, *ks = jax.random.split(key, 7)
        dw = 0.2 * jax.random.normal(ks[0], (9, cin), jnp.float32)       # (kh*3+kw, Cin)
        pw = (1.0 / np.sqrt(cin)) * jax.random.normal(ks[1], (cin, cout), jnp.float32)
        s1, b1 = _fold_bn(ks[2], ks[3], cin)    # SeparableConv2d.bn (after depthwise)
        s2, b2 = _fold_bn(ks[4], ks[5], cout)   # outer BatchNorm in rep
        params["steps"].append(dict(dw=dw, pw=pw, s1=s1, b1=b1, s2=s2, b2=b2))

    if out_channels != in_channels:
        key, k1, k2, k3 = jax.random.split(key, 4)
        skw = (1.0 / np.sqrt(in_channels)) * jax.random.normal(
            k1, (in_channels, out_channels), jnp.float32)
        ss, sb = _fold_bn(k2, k3, out_channels)
        params["skip"] = dict(w=skw, s=ss, b=sb)
    else:
        params["skip"] = None
    return params


# ----------------------------------------------------------------------------
# Pure-XLA reference (lax.conv) for correctness checking
# ----------------------------------------------------------------------------
def reference_forward(x_nchw, params, dilation=1):
    x = x_nchw
    inp = x_nchw
    for st in params["steps"]:
        cin = st["dw"].shape[1]
        cout = st["pw"].shape[1]
        y = jnp.maximum(x, 0.0)
        pad = dilation
        y = jnp.pad(y, ((0, 0), (0, 0), (pad, pad), (pad, pad)))
        dw_w = jnp.transpose(st["dw"].reshape(3, 3, cin), (2, 0, 1))[:, None]  # (Cin,1,3,3)
        y = lax.conv_general_dilated(
            y, dw_w, (1, 1), "VALID", rhs_dilation=(dilation, dilation),
            dimension_numbers=("NCHW", "OIHW", "NCHW"),
            feature_group_count=cin, precision=lax.Precision.HIGHEST)
        y = y * st["s1"].reshape(1, cin, 1, 1) + st["b1"].reshape(1, cin, 1, 1)
        pw_w = jnp.transpose(st["pw"], (1, 0))[:, :, None, None]               # (Cout,Cin,1,1)
        y = lax.conv_general_dilated(
            y, pw_w, (1, 1), "VALID", dimension_numbers=("NCHW", "OIHW", "NCHW"),
            precision=lax.Precision.HIGHEST)
        y = y * st["s2"].reshape(1, cout, 1, 1) + st["b2"].reshape(1, cout, 1, 1)
        x = y
    if params["skip"] is not None:
        sk = params["skip"]
        cout = sk["w"].shape[1]
        skw = jnp.transpose(sk["w"], (1, 0))[:, :, None, None]
        skip = lax.conv_general_dilated(
            inp, skw, (1, 1), "VALID", dimension_numbers=("NCHW", "OIHW", "NCHW"),
            precision=lax.Precision.HIGHEST)
        skip = skip * sk["s"].reshape(1, cout, 1, 1) + sk["b"].reshape(1, cout, 1, 1)
    else:
        skip = inp
    return x + skip


# ----------------------------------------------------------------------------
if __name__ == "__main__":
    key = jax.random.PRNGKey(0)
    kx, kp = jax.random.split(key)

    N, Cin, H, W = 2, 4, 16, 16
    Cout, reps, dilation = 8, 2, 1

    x = jax.random.normal(kx, (N, Cin, H, W), jnp.float32)
    params = init_block_params(kp, Cin, Cout, reps)

    fwd = jax.jit(block_forward, static_argnames=("dilation",))
    out = jax.block_until_ready(fwd(x, params, dilation=dilation))
    assert out.shape == (N, Cout, H, W), out.shape

    ref = reference_forward(x, params, dilation)
    np.testing.assert_allclose(np.asarray(out), np.asarray(ref),
                               atol=1e-4, rtol=1e-4)

    print("KERNEL_OK")
</pallas_src>

<mosaic_0001>
module attributes {stable_mosaic.version = 11 : i64} {
  func.func @kernel(%arg0: i32, %arg1: memref<1x4x512xf32, #tpu.memory_space<vmem>>, %arg2: memref<80x512xf32, #tpu.memory_space<vmem>>, %arg3: memref<1x8x512xf32, #tpu.memory_space<vmem>>) attributes {dimension_semantics = [#tpu.dimension_semantics<parallel>], iteration_bounds = array<i64: 1>, scalar_prefetch = 0 : i64, scratch_operands = 0 : i64, tpu.core_type = #tpu.core_type<tc>, window_params = [{transform_indices = @transform_0, window_bounds = array<i64: 1, 4, 512>}, {pipeline_mode = #tpu.pipeline_mode<synchronous>, transform_indices = @transform_1, window_bounds = array<i64: 80, 512>}, {transform_indices = @transform_2, window_bounds = array<i64: 1, 8, 512>}]} {
    %c0 = arith.constant 0 : index
    %c0_0 = arith.constant 0 : index
    %c0_1 = arith.constant 0 : index
    %0 = vector.load %arg1[%c0, %c0_0, %c0_1] : memref<1x4x512xf32, #tpu.memory_space<vmem>>, vector<1x4x512xf32>
    %1 = vector.shape_cast %0 : vector<1x4x512xf32> to vector<4x512xf32>
    %c0_2 = arith.constant 0 : index
    %c0_3 = arith.constant 0 : index
    %2 = vector.load %arg2[%c0_2, %c0_3] : memref<80x512xf32, #tpu.memory_space<vmem>>, vector<1x512xf32>
    %c1 = arith.constant 1 : index
    %c0_4 = arith.constant 0 : index
    %3 = vector.load %arg2[%c1, %c0_4] : memref<80x512xf32, #tpu.memory_space<vmem>>, vector<1x512xf32>
    %c2 = arith.constant 2 : index
    %c0_5 = arith.constant 0 : index
    %4 = vector.load %arg2[%c2, %c0_5] : memref<80x512xf32, #tpu.memory_space<vmem>>, vector<1x512xf32>
    %c3 = arith.constant 3 : index
    %c0_6 = arith.constant 0 : index
    %5 = vector.load %arg2[%c3, %c0_6] : memref<80x512xf32, #tpu.memory_space<vmem>>, vector<1x512xf32>
    %c5 = arith.constant 5 : index
    %c0_7 = arith.constant 0 : index
    %6 = vector.load %arg2[%c5, %c0_7] : memref<80x512xf32, #tpu.memory_space<vmem>>, vector<1x512xf32>
    %c6 = arith.constant 6 : index
    %c0_8 = arith.constant 0 : index
    %7 = vector.load %arg2[%c6, %c0_8] : memref<80x512xf32, #tpu.memory_space<vmem>>, vector<1x512xf32>
    %c7 = arith.constant 7 : index
    %c0_9 = arith.constant 0 : index
    %8 = vector.load %arg2[%c7, %c0_9] : memref<80x512xf32, #tpu.memory_space<vmem>>, vector<1x512xf32>
    %c8 = arith.constant 8 : index
    %c0_10 = arith.constant 0 : index
    %9 = vector.load %arg2[%c8, %c0_10] : memref<80x512xf32, #tpu.memory_space<vmem>>, vector<1x512xf32>
    %c16 = arith.constant 16 : index
    %c0_11 = arith.constant 0 : index
    %10 = vector.load %arg2[%c16, %c0_11] : memref<80x512xf32, #tpu.memory_space<vmem>>, vector<4x9xf32>
    %c24 = arith.constant 24 : index
    %c0_12 = arith.constant 0 : index
    %11 = vector.load %arg2[%c24, %c0_12] : memref<80x512xf32, #tpu.memory_space<vmem>>, vector<8x4xf32>
    %c32 = arith.constant 32 : index
    %c0_13 = arith.constant 0 : index
    %12 = vector.load %arg2[%c32, %c0_13] : memref<80x512xf32, #tpu.memory_space<vmem>>, vector<8x1xf32>
    %cst = arith.constant 0.000000e+00 : f32
    %13 = vector.broadcast %cst : f32 to vector<4x512xf32>
    %14 = arith.maximumf %1, %13 : vector<4x512xf32>
    %c17_i32 = arith.constant 17 : i32
    %15 = tpu.dynamic_rotate %14 by %c17_i32 dim 1 : vector<4x512xf32>, i32 -> vector<4x512xf32>
    %16 = vector.broadcast %2 : vector<1x512xf32> to vector<4x512xf32>
    %17 = arith.mulf %15, %16 : vector<4x512xf32>
    %18 = vector.extract_strided_slice %10 {offsets = [0, 0], sizes = [4, 1], strides = [1, 1]} : vector<4x9xf32> to vector<4x1xf32>
    %19 = vector.broadcast %18 : vector<4x1xf32> to vector<4x512xf32>
    %20 = arith.mulf %19, %17 : vector<4x512xf32>
    %c16_i32 = arith.constant 16 : i32
    %21 = tpu.dynamic_rotate %14 by %c16_i32 dim 1 : vector<4x512xf32>, i32 -> vector<4x512xf32>
    %22 = vector.broadcast %3 : vector<1x512xf32> to vector<4x512xf32>
    %23 = arith.mulf %21, %22 : vector<4x512xf32>
    %24 = vector.extract_strided_slice %10 {offsets = [0, 1], sizes = [4, 1], strides = [1, 1]} : vector<4x9xf32> to vector<4x1xf32>
    %25 = vector.broadcast %24 : vector<4x1xf32> to vector<4x512xf32>
    %26 = arith.mulf %25, %23 : vector<4x512xf32>
    %27 = arith.addf %20, %26 : vector<4x512xf32>
    %c15_i32 = arith.constant 15 : i32
    %28 = tpu.dynamic_rotate %14 by %c15_i32 dim 1 : vector<4x512xf32>, i32 -> vector<4x512xf32>
    %29 = vector.broadcast %4 : vector<1x512xf32> to vector<4x512xf32>
    %30 = arith.mulf %28, %29 : vector<4x512xf32>
    %31 = vector.extract_strided_slice %10 {offsets = [0, 2], sizes = [4, 1], strides = [1, 1]} : vector<4x9xf32> to vector<4x1xf32>
    %32 = vector.broadcast %31 : vector<4x1xf32> to vector<4x512xf32>
    %33 = arith.mulf %32, %30 : vector<4x512xf32>
    %34 = arith.addf %27, %33 : vector<4x512xf32>
    %c1_i32 = arith.constant 1 : i32
    %35 = tpu.dynamic_rotate %14 by %c1_i32 dim 1 : vector<4x512xf32>, i32 -> vector<4x512xf32>
    %36 = vector.broadcast %5 : vector<1x512xf32> to vector<4x512xf32>
    %37 = arith.mulf %35, %36 : vector<4x512xf32>
    %38 = vector.extract_strided_slice %10 {offsets = [0, 3], sizes = [4, 1], strides = [1, 1]} : vector<4x9xf32> to vector<4x1xf32>
    %39 = vector.broadcast %38 : vector<4x1xf32> to vector<4x512xf32>
    %40 = arith.mulf %39, %37 : vector<4x512xf32>
    %41 = arith.addf %34, %40 : vector<4x512xf32>
    %42 = vector.extract_strided_slice %10 {offsets = [0, 4], sizes = [4, 1], strides = [1, 1]} : vector<4x9xf32> to vector<4x1xf32>
    %43 = vector.broadcast %42 : vector<4x1xf32> to vector<4x512xf32>
    %44 = arith.mulf %43, %14 : vector<4x512xf32>
    %45 = arith.addf %41, %44 : vector<4x512xf32>
    %c511_i32 = arith.constant 511 : i32
    %46 = tpu.dynamic_rotate %14 by %c511_i32 dim 1 : vector<4x512xf32>, i32 -> vector<4x512xf32>
    %47 = vector.broadcast %6 : vector<1x512xf32> to vector<4x512xf32>
    %48 = arith.mulf %46, %47 : vector<4x512xf32>
    %49 = vector.extract_strided_slice %10 {offsets = [0, 5], sizes = [4, 1], strides = [1, 1]} : vector<4x9xf32> to vector<4x1xf32>
    %50 = vector.broadcast %49 : vector<4x1xf32> to vector<4x512xf32>
    %51 = arith.mulf %50, %48 : vector<4x512xf32>
    %52 = arith.addf %45, %51 : vector<4x512xf32>
    %c497_i32 = arith.constant 497 : i32
    %53 = tpu.dynamic_rotate %14 by %c497_i32 dim 1 : vector<4x512xf32>, i32 -> vector<4x512xf32>
    %54 = vector.broadcast %7 : vector<1x512xf32> to vector<4x512xf32>
    %55 = arith.mulf %53, %54 : vector<4x512xf32>
    %56 = vector.extract_strided_slice %10 {offsets = [0, 6], sizes = [4, 1], strides = [1, 1]} : vector<4x9xf32> to vector<4x1xf32>
    %57 = vector.broadcast %56 : vector<4x1xf32> to vector<4x512xf32>
    %58 = arith.mulf %57, %55 : vector<4x512xf32>
    %59 = arith.addf %52, %58 : vector<4x512xf32>
    %c496_i32 = arith.constant 496 : i32
    %60 = tpu.dynamic_rotate %14 by %c496_i32 dim 1 : vector<4x512xf32>, i32 -> vector<4x512xf32>
    %61 = vector.broadcast %8 : vector<1x512xf32> to vector<4x512xf32>
    %62 = arith.mulf %60, %61 : vector<4x512xf32>
    %63 = vector.extract_strided_slice %10 {offsets = [0, 7], sizes = [4, 1], strides = [1, 1]} : vector<4x9xf32> to vector<4x1xf32>
    %64 = vector.broadcast %63 : vector<4x1xf32> to vector<4x512xf32>
    %65 = arith.mulf %64, %62 : vector<4x512xf32>
    %66 = arith.addf %59, %65 : vector<4x512xf32>
    %c495_i32 = arith.constant 495 : i32
    %67 = tpu.dynamic_rotate %14 by %c495_i32 dim 1 : vector<4x512xf32>, i32 -> vector<4x512xf32>
    %68 = vector.broadcast %9 : vector<1x512xf32> to vector<4x512xf32>
    %69 = arith.mulf %67, %68 : vector<4x512xf32>
    %70 = vector.extract_strided_slice %10 {offsets = [0, 8], sizes = [4, 1], strides = [1, 1]} : vector<4x9xf32> to vector<4x1xf32>
    %71 = vector.broadcast %70 : vector<4x1xf32> to vector<4x512xf32>
    %72 = arith.mulf %71, %69 : vector<4x512xf32>
    %73 = arith.addf %66, %72 : vector<4x512xf32>
    %74 = vector.extract_strided_slice %11 {offsets = [0, 0], sizes = [8, 1], strides = [1, 1]} : vector<8x4xf32> to vector<8x1xf32>
    %75 = vector.extract_strided_slice %73 {offsets = [0, 0], sizes = [1, 512], strides = [1, 1]} : vector<4x512xf32> to vector<1x512xf32>
    %76 = vector.broadcast %74 : vector<8x1xf32> to vector<8x512xf32>
    %77 = vector.broadcast %75 : vector<1x512xf32> to vector<8x512xf32>
    %78 = arith.mulf %76, %77 : vector<8x512xf32>
    %79 = vector.extract_strided_slice %11 {offsets = [0, 1], sizes = [8, 1], strides = [1, 1]} : vector<8x4xf32> to vector<8x1xf32>
    %80 = vector.extract_strided_slice %73 {offsets = [1, 0], sizes = [1, 512], strides = [1, 1]} : vector<4x512xf32> to vector<1x512xf32>
    %81 = vector.broadcast %79 : vector<8x1xf32> to vector<8x512xf32>
    %82 = vector.broadcast %80 : vector<1x512xf32> to vector<8x512xf32>
    %83 = arith.mulf %81, %82 : vector<8x512xf32>
    %84 = arith.addf %78, %83 : vector<8x512xf32>
    %85 = vector.extract_strided_slice %11 {offsets = [0, 2], sizes = [8, 1], strides = [1, 1]} : vector<8x4xf32> to vector<8x1xf32>
    %86 = vector.extract_strided_slice %73 {offsets = [2, 0], sizes = [1, 512], strides = [1, 1]} : vector<4x512xf32> to vector<1x512xf32>
    %87 = vector.broadcast %85 : vector<8x1xf32> to vector<8x512xf32>
    %88 = vector.broadcast %86 : vector<1x512xf32> to vector<8x512xf32>
    %89 = arith.mulf %87, %88 : vector<8x512xf32>
    %90 = arith.addf %84, %89 : vector<8x512xf32>
    %91 = vector.extract_strided_slice %11 {offsets = [0, 3], sizes = [8, 1], strides = [1, 1]} : vector<8x4xf32> to vector<8x1xf32>
    %92 = vector.extract_strided_slice %73 {offsets = [3, 0], sizes = [1, 512], strides = [1, 1]} : vector<4x512xf32> to vector<1x512xf32>
    %93 = vector.broadcast %91 : vector<8x1xf32> to vector<8x512xf32>
    %94 = vector.broadcast %92 : vector<1x512xf32> to vector<8x512xf32>
    %95 = arith.mulf %93, %94 : vector<8x512xf32>
    %96 = arith.addf %90, %95 : vector<8x512xf32>
    %97 = vector.broadcast %12 : vector<8x1xf32> to vector<8x512xf32>
    %98 = arith.addf %96, %97 : vector<8x512xf32>
    %c40 = arith.constant 40 : index
    %c0_14 = arith.constant 0 : index
    %99 = vector.load %arg2[%c40, %c0_14] : memref<80x512xf32, #tpu.memory_space<vmem>>, vector<8x9xf32>
    %c48 = arith.constant 48 : index
    %c0_15 = arith.constant 0 : index
    %100 = vector.load %arg2[%c48, %c0_15] : memref<80x512xf32, #tpu.memory_space<vmem>>, vector<8x8xf32>
    %c56 = arith.constant 56 : index
    %c0_16 = arith.constant 0 : index
    %101 = vector.load %arg2[%c56, %c0_16] : memref<80x512xf32, #tpu.memory_space<vmem>>, vector<8x1xf32>
    %cst_17 = arith.constant 0.000000e+00 : f32
    %102 = vector.broadcast %cst_17 : f32 to vector<8x512xf32>
    %103 = arith.maximumf %98, %102 : vector<8x512xf32>
    %c17_i32_18 = arith.constant 17 : i32
    %104 = tpu.dynamic_rotate %103 by %c17_i32_18 dim 1 : vector<8x512xf32>, i32 -> vector<8x512xf32>
    %105 = vector.broadcast %2 : vector<1x512xf32> to vector<8x512xf32>
    %106 = arith.mulf %104, %105 : vector<8x512xf32>
    %107 = vector.extract_strided_slice %99 {offsets = [0, 0], sizes = [8, 1], strides = [1, 1]} : vector<8x9xf32> to vector<8x1xf32>
    %108 = vector.broadcast %107 : vector<8x1xf32> to vector<8x512xf32>
    %109 = arith.mulf %108, %106 : vector<8x512xf32>
    %c16_i32_19 = arith.constant 16 : i32
    %110 = tpu.dynamic_rotate %103 by %c16_i32_19 dim 1 : vector<8x512xf32>, i32 -> vector<8x512xf32>
    %111 = vector.broadcast %3 : vector<1x512xf32> to vector<8x512xf32>
    %112 = arith.mulf %110, %111 : vector<8x512xf32>
    %113 = vector.extract_strided_slice %99 {offsets = [0, 1], sizes = [8, 1], strides = [1, 1]} : vector<8x9xf32> to vector<8x1xf32>
    %114 = vector.broadcast %113 : vector<8x1xf32> to vector<8x512xf32>
    %115 = arith.mulf %114, %112 : vector<8x512xf32>
    %116 = arith.addf %109, %115 : vector<8x512xf32>
    %c15_i32_20 = arith.constant 15 : i32
    %117 = tpu.dynamic_rotate %103 by %c15_i32_20 dim 1 : vector<8x512xf32>, i32 -> vector<8x512xf32>
    %118 = vector.broadcast %4 : vector<1x512xf32> to vector<8x512xf32>
    %119 = arith.mulf %117, %118 : vector<8x512xf32>
    %120 = vector.extract_strided_slice %99 {offsets = [0, 2], sizes = [8, 1], strides = [1, 1]} : vector<8x9xf32> to vector<8x1xf32>
    %121 = vector.broadcast %120 : vector<8x1xf32> to vector<8x512xf32>
    %122 = arith.mulf %121, %119 : vector<8x512xf32>
    %123 = arith.addf %116, %122 : vector<8x512xf32>
    %c1_i32_21 = arith.constant 1 : i32
    %124 = tpu.dynamic_rotate %103 by %c1_i32_21 dim 1 : vector<8x512xf32>, i32 -> vector<8x512xf32>
    %125 = vector.broadcast %5 : vector<1x512xf32> to vector<8x512xf32>
    %126 = arith.mulf %124, %125 : vector<8x512xf32>
    %127 = vector.extract_strided_slice %99 {offsets = [0, 3], sizes = [8, 1], strides = [1, 1]} : vector<8x9xf32> to vector<8x1xf32>
    %128 = vector.broadcast %127 : vector<8x1xf32> to vector<8x512xf32>
    %129 = arith.mulf %128, %126 : vector<8x512xf32>
    %130 = arith.addf %123, %129 : vector<8x512xf32>
    %131 = vector.extract_strided_slice %99 {offsets = [0, 4], sizes = [8, 1], strides = [1, 1]} : vector<8x9xf32> to vector<8x1xf32>
    %132 = vector.broadcast %131 : vector<8x1xf32> to vector<8x512xf32>
    %133 = arith.mulf %132, %103 : vector<8x512xf32>
    %134 = arith.addf %130, %133 : vector<8x512xf32>
    %c511_i32_22 = arith.constant 511 : i32
    %135 = tpu.dynamic_rotate %103 by %c511_i32_22 dim 1 : vector<8x512xf32>, i32 -> vector<8x512xf32>
    %136 = vector.broadcast %6 : vector<1x512xf32> to vector<8x512xf32>
    %137 = arith.mulf %135, %136 : vector<8x512xf32>
    %138 = vector.extract_strided_slice %99 {offsets = [0, 5], sizes = [8, 1], strides = [1, 1]} : vector<8x9xf32> to vector<8x1xf32>
    %139 = vector.broadcast %138 : vector<8x1xf32> to vector<8x512xf32>
    %140 = arith.mulf %139, %137 : vector<8x512xf32>
    %141 = arith.addf %134, %140 : vector<8x512xf32>
    %c497_i32_23 = arith.constant 497 : i32
    %142 = tpu.dynamic_rotate %103 by %c497_i32_23 dim 1 : vector<8x512xf32>, i32 -> vector<8x512xf32>
    %143 = vector.broadcast %7 : vector<1x512xf32> to vector<8x512xf32>
    %144 = arith.mulf %142, %143 : vector<8x512xf32>
    %145 = vector.extract_strided_slice %99 {offsets = [0, 6], sizes = [8, 1], strides = [1, 1]} : vector<8x9xf32> to vector<8x1xf32>
    %146 = vector.broadcast %145 : vector<8x1xf32> to vector<8x512xf32>
    %147 = arith.mulf %146, %144 : vector<8x512xf32>
    %148 = arith.addf %141, %147 : vector<8x512xf32>
    %c496_i32_24 = arith.constant 496 : i32
    %149 = tpu.dynamic_rotate %103 by %c496_i32_24 dim 1 : vector<8x512xf32>, i32 -> vector<8x512xf32>
    %150 = vector.broadcast %8 : vector<1x512xf32> to vector<8x512xf32>
    %151 = arith.mulf %149, %150 : vector<8x512xf32>
    %152 = vector.extract_strided_slice %99 {offsets = [0, 7], sizes = [8, 1], strides = [1, 1]} : vector<8x9xf32> to vector<8x1xf32>
    %153 = vector.broadcast %152 : vector<8x1xf32> to vector<8x512xf32>
    %154 = arith.mulf %153, %151 : vector<8x512xf32>
    %155 = arith.addf %148, %154 : vector<8x512xf32>
    %c495_i32_25 = arith.constant 495 : i32
    %156 = tpu.dynamic_rotate %103 by %c495_i32_25 dim 1 : vector<8x512xf32>, i32 -> vector<8x512xf32>
    %157 = vector.broadcast %9 : vector<1x512xf32> to vector<8x512xf32>
    %158 = arith.mulf %156, %157 : vector<8x512xf32>
    %159 = vector.extract_strided_slice %99 {offsets = [0, 8], sizes = [8, 1], strides = [1, 1]} : vector<8x9xf32> to vector<8x1xf32>
    %160 = vector.broadcast %159 : vector<8x1xf32> to vector<8x512xf32>
    %161 = arith.mulf %160, %158 : vector<8x512xf32>
    %162 = arith.addf %155, %161 : vector<8x512xf32>
    %163 = vector.extract_strided_slice %100 {offsets = [0, 0], sizes = [8, 1], strides = [1, 1]} : vector<8x8xf32> to vector<8x1xf32>
    %164 = vector.extract_strided_slice %162 {offsets = [0, 0], sizes = [1, 512], strides = [1, 1]} : vector<8x512xf32> to vector<1x512xf32>
    %165 = vector.broadcast %163 : vector<8x1xf32> to vector<8x512xf32>
    %166 = vector.broadcast %164 : vector<1x512xf32> to vector<8x512xf32>
    %167 = arith.mulf %165, %166 : vector<8x512xf32>
    %168 = vector.extract_strided_slice %100 {offsets = [0, 1], sizes = [8, 1], strides = [1, 1]} : vector<8x8xf32> to vector<8x1xf32>
    %169 = vector.extract_strided_slice %162 {offsets = [1, 0], sizes = [1, 512], strides = [1, 1]} : vector<8x512xf32> to vector<1x512xf32>
    %170 = vector.broadcast %168 : vector<8x1xf32> to vector<8x512xf32>
    %171 = vector.broadcast %169 : vector<1x512xf32> to vector<8x512xf32>
    %172 = arith.mulf %170, %171 : vector<8x512xf32>
    %173 = arith.addf %167, %172 : vector<8x512xf32>
    %174 = vector.extract_strided_slice %100 {offsets = [0, 2], sizes = [8, 1], strides = [1, 1]} : vector<8x8xf32> to vector<8x1xf32>
    %175 = vector.extract_strided_slice %162 {offsets = [2, 0], sizes = [1, 512], strides = [1, 1]} : vector<8x512xf32> to vector<1x512xf32>
    %176 = vector.broadcast %174 : vector<8x1xf32> to vector<8x512xf32>
    %177 = vector.broadcast %175 : vector<1x512xf32> to vector<8x512xf32>
    %178 = arith.mulf %176, %177 : vector<8x512xf32>
    %179 = arith.addf %173, %178 : vector<8x512xf32>
    %180 = vector.extract_strided_slice %100 {offsets = [0, 3], sizes = [8, 1], strides = [1, 1]} : vector<8x8xf32> to vector<8x1xf32>
    %181 = vector.extract_strided_slice %162 {offsets = [3, 0], sizes = [1, 512], strides = [1, 1]} : vector<8x512xf32> to vector<1x512xf32>
    %182 = vector.broadcast %180 : vector<8x1xf32> to vector<8x512xf32>
    %183 = vector.broadcast %181 : vector<1x512xf32> to vector<8x512xf32>
    %184 = arith.mulf %182, %183 : vector<8x512xf32>
    %185 = arith.addf %179, %184 : vector<8x512xf32>
    %186 = vector.extract_strided_slice %100 {offsets = [0, 4], sizes = [8, 1], strides = [1, 1]} : vector<8x8xf32> to vector<8x1xf32>
    %187 = vector.extract_strided_slice %162 {offsets = [4, 0], sizes = [1, 512], strides = [1, 1]} : vector<8x512xf32> to vector<1x512xf32>
    %188 = vector.broadcast %186 : vector<8x1xf32> to vector<8x512xf32>
    %189 = vector.broadcast %187 : vector<1x512xf32> to vector<8x512xf32>
    %190 = arith.mulf %188, %189 : vector<8x512xf32>
    %191 = arith.addf %185, %190 : vector<8x512xf32>
    %192 = vector.extract_strided_slice %100 {offsets = [0, 5], sizes = [8, 1], strides = [1, 1]} : vector<8x8xf32> to vector<8x1xf32>
    %193 = vector.extract_strided_slice %162 {offsets = [5, 0], sizes = [1, 512], strides = [1, 1]} : vector<8x512xf32> to vector<1x512xf32>
    %194 = vector.broadcast %192 : vector<8x1xf32> to vector<8x512xf32>
    %195 = vector.broadcast %193 : vector<1x512xf32> to vector<8x512xf32>
    %196 = arith.mulf %194, %195 : vector<8x512xf32>
    %197 = arith.addf %191, %196 : vector<8x512xf32>
    %198 = vector.extract_strided_slice %100 {offsets = [0, 6], sizes = [8, 1], strides = [1, 1]} : vector<8x8xf32> to vector<8x1xf32>
    %199 = vector.extract_strided_slice %162 {offsets = [6, 0], sizes = [1, 512], strides = [1, 1]} : vector<8x512xf32> to vector<1x512xf32>
    %200 = vector.broadcast %198 : vector<8x1xf32> to vector<8x512xf32>
    %201 = vector.broadcast %199 : vector<1x512xf32> to vector<8x512xf32>
    %202 = arith.mulf %200, %201 : vector<8x512xf32>
    %203 = arith.addf %197, %202 : vector<8x512xf32>
    %204 = vector.extract_strided_slice %100 {offsets = [0, 7], sizes = [8, 1], strides = [1, 1]} : vector<8x8xf32> to vector<8x1xf32>
    %205 = vector.extract_strided_slice %162 {offsets = [7, 0], sizes = [1, 512], strides = [1, 1]} : vector<8x512xf32> to vector<1x512xf32>
    %206 = vector.broadcast %204 : vector<8x1xf32> to vector<8x512xf32>
    %207 = vector.broadcast %205 : vector<1x512xf32> to vector<8x512xf32>
    %208 = arith.mulf %206, %207 : vector<8x512xf32>
    %209 = arith.addf %203, %208 : vector<8x512xf32>
    %210 = vector.broadcast %101 : vector<8x1xf32> to vector<8x512xf32>
    %211 = arith.addf %209, %210 : vector<8x512xf32>
    %c64 = arith.constant 64 : index
    %c0_26 = arith.constant 0 : index
    %212 = vector.load %arg2[%c64, %c0_26] : memref<80x512xf32, #tpu.memory_space<vmem>>, vector<8x4xf32>
    %c72 = arith.constant 72 : index
    %c0_27 = arith.constant 0 : index
    %213 = vector.load %arg2[%c72, %c0_27] : memref<80x512xf32, #tpu.memory_space<vmem>>, vector<8x1xf32>
    %214 = vector.extract_strided_slice %212 {offsets = [0, 0], sizes = [8, 1], strides = [1, 1]} : vector<8x4xf32> to vector<8x1xf32>
    %215 = vector.extract_strided_slice %1 {offsets = [0, 0], sizes = [1, 512], strides = [1, 1]} : vector<4x512xf32> to vector<1x512xf32>
    %216 = vector.broadcast %214 : vector<8x1xf32> to vector<8x512xf32>
    %217 = vector.broadcast %215 : vector<1x512xf32> to vector<8x512xf32>
    %218 = arith.mulf %216, %217 : vector<8x512xf32>
    %219 = vector.extract_strided_slice %212 {offsets = [0, 1], sizes = [8, 1], strides = [1, 1]} : vector<8x4xf32> to vector<8x1xf32>
    %220 = vector.extract_strided_slice %1 {offsets = [1, 0], sizes = [1, 512], strides = [1, 1]} : vector<4x512xf32> to vector<1x512xf32>
    %221 = vector.broadcast %219 : vector<8x1xf32> to vector<8x512xf32>
    %222 = vector.broadcast %220 : vector<1x512xf32> to vector<8x512xf32>
    %223 = arith.mulf %221, %222 : vector<8x512xf32>
    %224 = arith.addf %218, %223 : vector<8x512xf32>
    %225 = vector.extract_strided_slice %212 {offsets = [0, 2], sizes = [8, 1], strides = [1, 1]} : vector<8x4xf32> to vector<8x1xf32>
    %226 = vector.extract_strided_slice %1 {offsets = [2, 0], sizes = [1, 512], strides = [1, 1]} : vector<4x512xf32> to vector<1x512xf32>
    %227 = vector.broadcast %225 : vector<8x1xf32> to vector<8x512xf32>
    %228 = vector.broadcast %226 : vector<1x512xf32> to vector<8x512xf32>
    %229 = arith.mulf %227, %228 : vector<8x512xf32>
    %230 = arith.addf %224, %229 : vector<8x512xf32>
    %231 = vector.extract_strided_slice %212 {offsets = [0, 3], sizes = [8, 1], strides = [1, 1]} : vector<8x4xf32> to vector<8x1xf32>
    %232 = vector.extract_strided_slice %1 {offsets = [3, 0], sizes = [1, 512], strides = [1, 1]} : vector<4x512xf32> to vector<1x512xf32>
    %233 = vector.broadcast %231 : vector<8x1xf32> to vector<8x512xf32>
    %234 = vector.broadcast %232 : vector<1x512xf32> to vector<8x512xf32>
    %235 = arith.mulf %233, %234 : vector<8x512xf32>
    %236 = arith.addf %230, %235 : vector<8x512xf32>
    %237 = vector.broadcast %213 : vector<8x1xf32> to vector<8x512xf32>
    %238 = arith.addf %236, %237 : vector<8x512xf32>
    %239 = arith.addf %211, %238 : vector<8x512xf32>
    %c0_28 = arith.constant 0 : index
    %c0_29 = arith.constant 0 : index
    %c0_30 = arith.constant 0 : index
    %240 = vector.load %arg3[%c0_28, %c0_29, %c0_30] : memref<1x8x512xf32, #tpu.memory_space<vmem>>, vector<1x8x512xf32>
    %241 = vector.shape_cast %240 : vector<1x8x512xf32> to vector<8x512xf32>
    %242 = vector.shape_cast %239 : vector<8x512xf32> to vector<1x8x512xf32>
    tpu.vector_store %arg3[%c0_28, %c0_29, %c0_30], %242 {strides = array<i32>} : memref<1x8x512xf32, #tpu.memory_space<vmem>>, vector<1x8x512xf32>,
    return
  }
  func.func @transform_0(%arg0: i32) -> (i32, i32, i32) {
    %c0_i32 = arith.constant 0 : i32
    %c0_i32_0 = arith.constant 0 : i32
    %c0_i32_1 = arith.constant 0 : i32
    return %arg0, %c0_i32, %c0_i32_0 : i32, i32, i32
  }
  func.func @transform_1(%arg0: i32) -> (i32, i32) {
    %c0_i32 = arith.constant 0 : i32
    %c0_i32_0 = arith.constant 0 : i32
    %c0_i32_1 = arith.constant 0 : i32
    return %c0_i32, %c0_i32_0 : i32, i32
  }
  func.func @transform_2(%arg0: i32) -> (i32, i32, i32) {
    %c0_i32 = arith.constant 0 : i32
    %c0_i32_0 = arith.constant 0 : i32
    %c0_i32_1 = arith.constant 0 : i32
    return %arg0, %c0_i32, %c0_i32_0 : i32, i32, i32
  }
}

</mosaic_0001>

<llo_original>
// kernel: block_forward.1
$region0: #{block_forward.1}
  #allocation0 [shape = 'u32[]', space=smem, size = 0x4, offset = 0x4, fixed_abs, tag = 'smem constant byte address 0x4 - core index']
  #allocation1 [shape = 'u32[144,128]{1,0:T(1,128)}', space=vmem, size = 0x12000, scoped, tag = 'internal scratch']
  %s0 = inlined_call_operand.vmem [shape: f32[1,4,512], index: 0, kind: input, shape index: {}]
  %s1 = inlined_call_operand.vmem [shape: f32[80,512], index: 1, kind: input, shape index: {}]
  %s2 = inlined_call_operand.vmem [shape: f32[1,8,512], index: 2, kind: output, shape index: {}]
  %s3 = sld [smem:[#allocation0]]
  $region18: #{block_forward.1} parent=0
    _
  %s5 = ssub.s32 1, %s3
  %s6 = scalar_select 0, %s5, %s3
  // Predicated region
  $region2: #{block_forward.1} parent=0 // pred_check
    _
  $region3: #{block_forward.1} parent=0 // pred_check_branch
    %8 = sbr.rel (0) target = $region5
  $region4: #{block_forward.1} parent=0 // pred_region
    _
  $region5: #{block_forward.1} parent=0 // pred_fallthru
    _
  // Predicated region
  $region6: #{block_forward.1} parent=0 // pred_check
    _
  $region7: #{block_forward.1} parent=0 // pred_check_branch
    %10 = sbr.rel (0) target = $region9
  $region8: #{block_forward.1} parent=0 // pred_region
    _
  $region9: #{block_forward.1} parent=0 // pred_fallthru
    _
  %v11 = vld [vmem:[%s0] sm:$0xff]
  %v12 = vld [vmem:[%s0 + $0x8] sm:$0xff]
  %v13 = vld [vmem:[%s1] ss:$8 sm:$0xf]
  %s14 = scalar_lea.vmem %s1, 1
  %v15 = vld [vmem:[%s14] ss:$8 sm:$0xf]
  %s16 = scalar_lea.vmem %s1, 2
  %v17 = vld [vmem:[%s16] ss:$8 sm:$0xf]
  %s18 = scalar_lea.vmem %s1, 3
  %v19 = vld [vmem:[%s18] ss:$8 sm:$0xf]
  %s20 = scalar_lea.vmem %s1, 5
  %v21 = vld [vmem:[%s20] ss:$8 sm:$0xf]
  %s22 = scalar_lea.vmem %s1, 6
  %v23 = vld [vmem:[%s22] ss:$8 sm:$0xf]
  %s24 = scalar_lea.vmem %s1, 7
  %v25 = vld [vmem:[%s24] ss:$8 sm:$0xf]
  %s26 = scalar_lea.vmem %s1, 32
  %v27 = vld [vmem:[%s26] ss:$8 sm:$0xf]
  %v28 = vld [vmem:[%s1 + $0x40] sm:$0xf]
  %v29 = vld [vmem:[%s1 + $0x60] sm:$0xff]
  %v30 = vld [vmem:[%s1 + $0x80] sm:$0xff]
  %v31 = vmax.f32 %v11, 0.0
  %v32 = vmax.f32 %v12, 0.0
  %v35 = vcombine.high %v31, %v31
  %v36 = vcombine.high %v32, %v32
  %39 = vrot.lane.b32.xlu0 %v31, 17
  %v40 = vpop.permute.xlu0 %39
  %41 = vrot.lane.b32.xlu0 %v35, 17
  %v42 = vpop.permute.xlu0 %41
  %43 = vrot.lane.b32.xlu0 %v32, 17
  %v44 = vpop.permute.xlu0 %43
  %45 = vrot.lane.b32.xlu0 %v36, 17
  %v46 = vpop.permute.xlu0 %45
  %v47 = vlaneseq
  %v48 = vand.u32 %v47, 127
  %vm49 = vcmp.lt.s32.totalorder %v48, 17
  %v50 = vsel %vm49, %v44, %v46
  %v51 = vsel %vm49, %v42, %v44
  %v52 = vsel %vm49, %v40, %v42
  %v53 = vsel %vm49, %v46, %v40
  %v55 = vlaneseq
  %v56 = vshrl.u32 %v55, 7
  %v57 = vsub.s32 0, %v56
  %v58 = vrot.slane %v13, %v57
  %v59 = vlaneseq
  %v60 = vshrl.u32 %v59, 7
  %v61 = vsub.s32 1, %v60
  %v62 = vrot.slane %v13, %v61
  %v63 = vlaneseq
  %v64 = vshrl.u32 %v63, 7
  %v65 = vsub.s32 2, %v64
  %v66 = vrot.slane %v13, %v65
  %v67 = vlaneseq
  %v68 = vshrl.u32 %v67, 7
  %v69 = vsub.s32 3, %v68
  %v70 = vrot.slane %v13, %v69
  %v75 = vmul.f32 %v53, %v58
  %v76 = vmul.f32 %v52, %v62
  %v77 = vmul.f32 %v51, %v66
  %v78 = vmul.f32 %v50, %v70
  %80 = vset.pattern.permute.xlu0 0
  %81 = vperm.xlu0 %80, %v28
  %v82 = vpop.permute.xlu0 %81
  %v84 = vmul.f32 %v82, %v75
  %v85 = vmul.f32 %v82, %v76
  %v86 = vmul.f32 %v82, %v77
  %v87 = vmul.f32 %v82, %v78
  %88 = vrot.lane.b32.xlu0 %v31, 16
  %v89 = vpop.permute.xlu0 %88
  %90 = vrot.lane.b32.xlu0 %v35, 16
  %v91 = vpop.permute.xlu0 %90
  %92 = vrot.lane.b32.xlu0 %v32, 16
  %v93 = vpop.permute.xlu0 %92
  %94 = vrot.lane.b32.xlu0 %v36, 16
  %v95 = vpop.permute.xlu0 %94
  %vm96 = vcmp.lt.s32.totalorder %v48, 16
  %v97 = vsel %vm96, %v93, %v95
  %v98 = vsel %vm96, %v91, %v93
  %v99 = vsel %vm96, %v89, %v91
  %v100 = vsel %vm96, %v95, %v89
  %v102 = vlaneseq
  %v103 = vshrl.u32 %v102, 7
  %v104 = vsub.s32 0, %v103
  %v105 = vrot.slane %v15, %v104
  %v106 = vlaneseq
  %v107 = vshrl.u32 %v106, 7
  %v108 = vsub.s32 1, %v107
  %v109 = vrot.slane %v15, %v108
  %v110 = vlaneseq
  %v111 = vshrl.u32 %v110, 7
  %v112 = vsub.s32 2, %v111
  %v113 = vrot.slane %v15, %v112
  %v114 = vlaneseq
  %v115 = vshrl.u32 %v114, 7
  %v116 = vsub.s32 3, %v115
  %v117 = vrot.slane %v15, %v116
  %v122 = vmul.f32 %v100, %v105
  %v123 = vmul.f32 %v99, %v109
  %v124 = vmul.f32 %v98, %v113
  %v125 = vmul.f32 %v97, %v117
  %126 = vset.pattern.permute.xlu0 1
  %127 = vperm.xlu0 %126, %v28
  %v128 = vpop.permute.xlu0 %127
  %v130 = vmul.f32 %v128, %v122
  %v131 = vmul.f32 %v128, %v123
  %v132 = vmul.f32 %v128, %v124
  %v133 = vmul.f32 %v128, %v125
  %v134 = vadd.f32 %v84, %v130
  %v135 = vadd.f32 %v85, %v131
  %v136 = vadd.f32 %v86, %v132
  %v137 = vadd.f32 %v87, %v133
  %138 = vrot.lane.b32.xlu0 %v31, 15
  %v139 = vpop.permute.xlu0 %138
  %140 = vrot.lane.b32.xlu0 %v35, 15
  %v141 = vpop.permute.xlu0 %140
  %142 = vrot.lane.b32.xlu0 %v32, 15
  %v143 = vpop.permute.xlu0 %142
  %144 = vrot.lane.b32.xlu0 %v36, 15
  %v145 = vpop.permute.xlu0 %144
  %vm146 = vcmp.lt.s32.totalorder %v48, 15
  %v147 = vsel %vm146, %v143, %v145
  %v148 = vsel %vm146, %v141, %v143
  %v149 = vsel %vm146, %v139, %v141
  %v150 = vsel %vm146, %v145, %v139
  %v152 = vlaneseq
  %v153 = vshrl.u32 %v152, 7
  %v154 = vsub.s32 0, %v153
  %v155 = vrot.slane %v17, %v154
  %v156 = vlaneseq
  %v157 = vshrl.u32 %v156, 7
  %v158 = vsub.s32 1, %v157
  %v159 = vrot.slane %v17, %v158
  %v160 = vlaneseq
  %v161 = vshrl.u32 %v160, 7
  %v162 = vsub.s32 2, %v161
  %v163 = vrot.slane %v17, %v162
  %v164 = vlaneseq
  %v165 = vshrl.u32 %v164, 7
  %v166 = vsub.s32 3, %v165
  %v167 = vrot.slane %v17, %v166
  %v172 = vmul.f32 %v150, %v155
  %v173 = vmul.f32 %v149, %v159
  %v174 = vmul.f32 %v148, %v163
  %v175 = vmul.f32 %v147, %v167
  %176 = vset.pattern.permute.xlu0 2
  %177 = vperm.xlu0 %176, %v28
  %v178 = vpop.permute.xlu0 %177
  %v180 = vmul.f32 %v178, %v172
  %v181 = vmul.f32 %v178, %v173
  %v182 = vmul.f32 %v178, %v174
  %v183 = vmul.f32 %v178, %v175
  %v184 = vadd.f32 %v134, %v180
  %v185 = vadd.f32 %v135, %v181
  %v186 = vadd.f32 %v136, %v182
  %v187 = vadd.f32 %v137, %v183
  %188 = vrot.lane.b32.xlu0 %v31, 1
  %v189 = vpop.permute.xlu0 %188
  %190 = vrot.lane.b32.xlu0 %v35, 1
  %v191 = vpop.permute.xlu0 %190
  %192 = vrot.lane.b32.xlu0 %v32, 1
  %v193 = vpop.permute.xlu0 %192
  %194 = vrot.lane.b32.xlu0 %v36, 1
  %v195 = vpop.permute.xlu0 %194
  %vm196 = vcmp.lt.s32.totalorder %v48, 1
  %v197 = vsel %vm196, %v193, %v195
  %v198 = vsel %vm196, %v191, %v193
  %v199 = vsel %vm196, %v189, %v191
  %v200 = vsel %vm196, %v195, %v189
  %v202 = vlaneseq
  %v203 = vshrl.u32 %v202, 7
  %v204 = vsub.s32 0, %v203
  %v205 = vrot.slane %v19, %v204
  %v206 = vlaneseq
  %v207 = vshrl.u32 %v206, 7
  %v208 = vsub.s32 1, %v207
  %v209 = vrot.slane %v19, %v208
  %v210 = vlaneseq
  %v211 = vshrl.u32 %v210, 7
  %v212 = vsub.s32 2, %v211
  %v213 = vrot.slane %v19, %v212
  %v214 = vlaneseq
  %v215 = vshrl.u32 %v214, 7
  %v216 = vsub.s32 3, %v215
  %v217 = vrot.slane %v19, %v216
  %v222 = vmul.f32 %v200, %v205
  %v223 = vmul.f32 %v199, %v209
  %v224 = vmul.f32 %v198, %v213
  %v225 = vmul.f32 %v197, %v217
  %226 = vset.pattern.permute.xlu0 3
  %227 = vperm.xlu0 %226, %v28
  %v228 = vpop.permute.xlu0 %227
  %v230 = vmul.f32 %v228, %v222
  %v231 = vmul.f32 %v228, %v223
  %v232 = vmul.f32 %v228, %v224
  %v233 = vmul.f32 %v228, %v225
  %v234 = vadd.f32 %v184, %v230
  %v235 = vadd.f32 %v185, %v231
  %v236 = vadd.f32 %v186, %v232
  %v237 = vadd.f32 %v187, %v233
  %238 = vset.pattern.permute.xlu0 4
  %239 = vperm.xlu0 %238, %v28
  %v240 = vpop.permute.xlu0 %239
  %v242 = vmul.f32 %v240, %v31
  %v243 = vmul.f32 %v240, %v35
  %v244 = vmul.f32 %v240, %v32
  %v245 = vmul.f32 %v240, %v36
  %v246 = vadd.f32 %v234, %v242
  %v247 = vadd.f32 %v235, %v243
  %v248 = vadd.f32 %v236, %v244
  %v249 = vadd.f32 %v237, %v245
  %250 = vrot.lane.b32.xlu0 %v31, 127
  %v251 = vpop.permute.xlu0 %250
  %252 = vrot.lane.b32.xlu0 %v35, 127
  %v253 = vpop.permute.xlu0 %252
  %254 = vrot.lane.b32.xlu0 %v32, 127
  %v255 = vpop.permute.xlu0 %254
  %256 = vrot.lane.b32.xlu0 %v36, 127
  %v257 = vpop.permute.xlu0 %256
  %vm258 = vcmp.lt.s32.totalorder %v48, 127
  %v259 = vsel %vm258, %v255, %v257
  %v260 = vsel %vm258, %v253, %v255
  %v261 = vsel %vm258, %v251, %v253
  %v262 = vsel %vm258, %v257, %v251
  %v264 = vlaneseq
  %v265 = vshrl.u32 %v264, 7
  %v266 = vsub.s32 0, %v265
  %v267 = vrot.slane %v21, %v266
  %v268 = vlaneseq
  %v269 = vshrl.u32 %v268, 7
  %v270 = vsub.s32 1, %v269
  %v271 = vrot.slane %v21, %v270
  %v272 = vlaneseq
  %v273 = vshrl.u32 %v272, 7
  %v274 = vsub.s32 2, %v273
  %v275 = vrot.slane %v21, %v274
  %v276 = vlaneseq
  %v277 = vshrl.u32 %v276, 7
  %v278 = vsub.s32 3, %v277
  %v279 = vrot.slane %v21, %v278
  %v284 = vmul.f32 %v261, %v267
  %v285 = vmul.f32 %v260, %v271
  %v286 = vmul.f32 %v259, %v275
  %v287 = vmul.f32 %v262, %v279
  %288 = vset.pattern.permute.xlu0 5
  %289 = vperm.xlu0 %288, %v28
  %v290 = vpop.permute.xlu0 %289
  %v292 = vmul.f32 %v290, %v284
  %v293 = vmul.f32 %v290, %v285
  %v294 = vmul.f32 %v290, %v286
  %v295 = vmul.f32 %v290, %v287
  %v296 = vadd.f32 %v246, %v292
  %v297 = vadd.f32 %v247, %v293
  %v298 = vadd.f32 %v248, %v294
  %v299 = vadd.f32 %v249, %v295
  %300 = vrot.lane.b32.xlu0 %v31, 113
  %v301 = vpop.permute.xlu0 %300
  %302 = vrot.lane.b32.xlu0 %v35, 113
  %v303 = vpop.permute.xlu0 %302
  %304 = vrot.lane.b32.xlu0 %v32, 113
  %v305 = vpop.permute.xlu0 %304
  %306 = vrot.lane.b32.xlu0 %v36, 113
  %v307 = vpop.permute.xlu0 %306
  %vm308 = vcmp.lt.s32.totalorder %v48, 113
  %v309 = vsel %vm308, %v305, %v307
  %v310 = vsel %vm308, %v303, %v305
  %v311 = vsel %vm308, %v301, %v303
  %v312 = vsel %vm308, %v307, %v301
  %v314 = vlaneseq
  %v315 = vshrl.u32 %v314, 7
  %v316 = vsub.s32 0, %v315
  %v317 = vrot.slane %v23, %v316
  %v318 = vlaneseq
  %v319 = vshrl.u32 %v318, 7
  %v320 = vsub.s32 1, %v319
  %v321 = vrot.slane %v23, %v320
  %v322 = vlaneseq
  %v323 = vshrl.u32 %v322, 7
  %v324 = vsub.s32 2, %v323
  %v325 = vrot.slane %v23, %v324
  %v326 = vlaneseq
  %v327 = vshrl.u32 %v326, 7
  %v328 = vsub.s32 3, %v327
  %v329 = vrot.slane %v23, %v328
  %v334 = vmul.f32 %v311, %v317
  %v335 = vmul.f32 %v310, %v321
  %v336 = vmul.f32 %v309, %v325
  %v337 = vmul.f32 %v312, %v329
  %338 = vset.pattern.permute.xlu0 6
  %339 = vperm.xlu0 %338, %v28
  %v340 = vpop.permute.xlu0 %339
  %v342 = vmul.f32 %v340, %v334
  %v343 = vmul.f32 %v340, %v335
  %v344 = vmul.f32 %v340, %v336
  %v345 = vmul.f32 %v340, %v337
  %v346 = vadd.f32 %v296, %v342
  %v347 = vadd.f32 %v297, %v343
  %v348 = vadd.f32 %v298, %v344
  %v349 = vadd.f32 %v299, %v345
  %350 = vrot.lane.b32.xlu0 %v31, 112
  %v351 = vpop.permute.xlu0 %350
  %352 = vrot.lane.b32.xlu0 %v35, 112
  %v353 = vpop.permute.xlu0 %352
  %354 = vrot.lane.b32.xlu0 %v32, 112
  %v355 = vpop.permute.xlu0 %354
  %356 = vrot.lane.b32.xlu0 %v36, 112
  %v357 = vpop.permute.xlu0 %356
  %vm358 = vcmp.lt.s32.totalorder %v48, 112
  %v359 = vsel %vm358, %v355, %v357
  %v360 = vsel %vm358, %v353, %v355
  %v361 = vsel %vm358, %v351, %v353
  %v362 = vsel %vm358, %v357, %v351
  %v364 = vlaneseq
  %v365 = vshrl.u32 %v364, 7
  %v366 = vsub.s32 0, %v365
  %v367 = vrot.slane %v25, %v366
  %v368 = vlaneseq
  %v369 = vshrl.u32 %v368, 7
  %v370 = vsub.s32 1, %v369
  %v371 = vrot.slane %v25, %v370
  %v372 = vlaneseq
  %v373 = vshrl.u32 %v372, 7
  %v374 = vsub.s32 2, %v373
  %v375 = vrot.slane %v25, %v374
  %v376 = vlaneseq
  %v377 = vshrl.u32 %v376, 7
  %v378 = vsub.s32 3, %v377
  %v379 = vrot.slane %v25, %v378
  %v384 = vmul.f32 %v361, %v367
  %v385 = vmul.f32 %v360, %v371
  %v386 = vmul.f32 %v359, %v375
  %v387 = vmul.f32 %v362, %v379
  %388 = vset.pattern.permute.xlu0 7
  %389 = vperm.xlu0 %388, %v28
  %v390 = vpop.permute.xlu0 %389
  %v392 = vmul.f32 %v390, %v384
  %v393 = vmul.f32 %v390, %v385
  %v394 = vmul.f32 %v390, %v386
  %v395 = vmul.f32 %v390, %v387
  %v396 = vadd.f32 %v346, %v392
  %v397 = vadd.f32 %v347, %v393
  %v398 = vadd.f32 %v348, %v394
  %v399 = vadd.f32 %v349, %v395
  %400 = vrot.lane.b32.xlu0 %v31, 111
  %v401 = vpop.permute.xlu0 %400
  %402 = vrot.lane.b32.xlu0 %v35, 111
  %v403 = vpop.permute.xlu0 %402
  %404 = vrot.lane.b32.xlu0 %v32, 111
  %v405 = vpop.permute.xlu0 %404
  %406 = vrot.lane.b32.xlu0 %v36, 111
  %v407 = vpop.permute.xlu0 %406
  %vm408 = vcmp.lt.s32.totalorder %v48, 111
  %v409 = vsel %vm408, %v405, %v407
  %v410 = vsel %vm408, %v403, %v405
  %v411 = vsel %vm408, %v401, %v403
  %v412 = vsel %vm408, %v407, %v401
  %v414 = vlaneseq
  %v415 = vshrl.u32 %v414, 7
  %v416 = vsub.s32 0, %v415
  %v417 = vrot.slane %v27, %v416
  %v418 = vlaneseq
  %v419 = vshrl.u32 %v418, 7
  %v420 = vsub.s32 1, %v419
  %v421 = vrot.slane %v27, %v420
  %v422 = vlaneseq
  %v423 = vshrl.u32 %v422, 7
  %v424 = vsub.s32 2, %v423
  %v425 = vrot.slane %v27, %v424
  %v426 = vlaneseq
  %v427 = vshrl.u32 %v426, 7
  %v428 = vsub.s32 3, %v427
  %v429 = vrot.slane %v27, %v428
  %v434 = vmul.f32 %v411, %v417
  %v435 = vmul.f32 %v410, %v421
  %v436 = vmul.f32 %v409, %v425
  %v437 = vmul.f32 %v412, %v429
  %438 = vset.pattern.permute.xlu0 8
  %439 = vperm.xlu0 %438, %v28
  %v440 = vpop.permute.xlu0 %439
  %v442 = vmul.f32 %v440, %v434
  %v443 = vmul.f32 %v440, %v435
  %v444 = vmul.f32 %v440, %v436
  %v445 = vmul.f32 %v440, %v437
  %v446 = vadd.f32 %v396, %v442
  %v447 = vadd.f32 %v397, %v443
  %v448 = vadd.f32 %v398, %v444
  %v449 = vadd.f32 %v399, %v445
  %451 = vset.pattern.permute.xlu0 0
  %452 = vperm.xlu0 %451, %v29
  %v453 = vpop.permute.xlu0 %452
  %v455 = vlaneseq
  %v456 = vshrl.u32 %v455, 7
  %v457 = vsub.s32 0, %v456
  %v458 = vrot.slane %v446, %v457
  %v459 = vlaneseq
  %v460 = vshrl.u32 %v459, 7
  %v461 = vsub.s32 0, %v460
  %v462 = vrot.slane %v447, %v461
  %v463 = vlaneseq
  %v464 = vshrl.u32 %v463, 7
  %v465 = vsub.s32 0, %v464
  %v466 = vrot.slane %v448, %v465
  %v467 = vlaneseq
  %v468 = vshrl.u32 %v467, 7
  %v469 = vsub.s32 0, %v468
  %v470 = vrot.slane %v449, %v469
  %v471 = vmul.f32 %v453, %v458
  %v472 = vmul.f32 %v453, %v462
  %v473 = vmul.f32 %v453, %v466
  %v474 = vmul.f32 %v453, %v470
  %475 = vset.pattern.permute.xlu0 1
  %476 = vperm.xlu0 %475, %v29
  %v477 = vpop.permute.xlu0 %476
  %v479 = vlaneseq
  %v480 = vshrl.u32 %v479, 7
  %v481 = vsub.s32 1, %v480
  %v482 = vrot.slane %v446, %v481
  %v483 = vlaneseq
  %v484 = vshrl.u32 %v483, 7
  %v485 = vsub.s32 1, %v484
  %v486 = vrot.slane %v447, %v485
  %v487 = vlaneseq
  %v488 = vshrl.u32 %v487, 7
  %v489 = vsub.s32 1, %v488
  %v490 = vrot.slane %v448, %v489
  %v491 = vlaneseq
  %v492 = vshrl.u32 %v491, 7
  %v493 = vsub.s32 1, %v492
  %v494 = vrot.slane %v449, %v493
  %v495 = vmul.f32 %v477, %v482
  %v496 = vmul.f32 %v477, %v486
  %v497 = vmul.f32 %v477, %v490
  %v498 = vmul.f32 %v477, %v494
  %v499 = vadd.f32 %v471, %v495
  %v500 = vadd.f32 %v472, %v496
  %v501 = vadd.f32 %v473, %v497
  %v502 = vadd.f32 %v474, %v498
  %503 = vset.pattern.permute.xlu0 2
  %504 = vperm.xlu0 %503, %v29
  %v505 = vpop.permute.xlu0 %504
  %v507 = vlaneseq
  %v508 = vshrl.u32 %v507, 7
  %v509 = vsub.s32 2, %v508
  %v510 = vrot.slane %v446, %v509
  %v511 = vlaneseq
  %v512 = vshrl.u32 %v511, 7
  %v513 = vsub.s32 2, %v512
  %v514 = vrot.slane %v447, %v513
  %v515 = vlaneseq
  %v516 = vshrl.u32 %v515, 7
  %v517 = vsub.s32 2, %v516
  %v518 = vrot.slane %v448, %v517
  %v519 = vlaneseq
  %v520 = vshrl.u32 %v519, 7
  %v521 = vsub.s32 2, %v520
  %v522 = vrot.slane %v449, %v521
  %v523 = vmul.f32 %v505, %v510
  %v524 = vmul.f32 %v505, %v514
  %v525 = vmul.f32 %v505, %v518
  %v526 = vmul.f32 %v505, %v522
  %v527 = vadd.f32 %v499, %v523
  %v528 = vadd.f32 %v500, %v524
  %v529 = vadd.f32 %v501, %v525
  %v530 = vadd.f32 %v502, %v526
  %531 = vset.pattern.permute.xlu0 3
  %532 = vperm.xlu0 %531, %v29
  %v533 = vpop.permute.xlu0 %532
  %v535 = vlaneseq
  %v536 = vshrl.u32 %v535, 7
  %v537 = vsub.s32 3, %v536
  %v538 = vrot.slane %v446, %v537
  %v539 = vlaneseq
  %v540 = vshrl.u32 %v539, 7
  %v541 = vsub.s32 3, %v540
  %v542 = vrot.slane %v447, %v541
  %v543 = vlaneseq
  %v544 = vshrl.u32 %v543, 7
  %v545 = vsub.s32 3, %v544
  %v546 = vrot.slane %v448, %v545
  %v547 = vlaneseq
  %v548 = vshrl.u32 %v547, 7
  %v549 = vsub.s32 3, %v548
  %v550 = vrot.slane %v449, %v549
  %v551 = vmul.f32 %v533, %v538
  %v552 = vmul.f32 %v533, %v542
  %v553 = vmul.f32 %v533, %v546
  %v554 = vmul.f32 %v533, %v550
  %v555 = vadd.f32 %v527, %v551
  %v556 = vadd.f32 %v528, %v552
  %v557 = vadd.f32 %v529, %v553
  %v558 = vadd.f32 %v530, %v554
  %560 = vset.pattern.permute.xlu0 0
  %561 = vperm.xlu0 %560, %v30
  %v562 = vpop.permute.xlu0 %561
  %v564 = vadd.f32 %v555, %v562
  %v565 = vadd.f32 %v556, %v562
  %v566 = vadd.f32 %v557, %v562
  %v567 = vadd.f32 %v558, %v562
  %v568 = vld [vmem:[%s1 + $0xa0] sm:$0xff]
  %v569 = vld [vmem:[%s1 + $0xc0] sm:$0xff]
  %v570 = vld [vmem:[%s1 + $0xe0] sm:$0xff]
  %v571 = vmax.f32 %v564, 0.0
  %v572 = vmax.f32 %v565, 0.0
  %v573 = vmax.f32 %v566, 0.0
  %v574 = vmax.f32 %v567, 0.0
  %575 = vrot.lane.b32.xlu0 %v571, 17
  %v576 = vpop.permute.xlu0 %575
  %577 = vrot.lane.b32.xlu0 %v572, 17
  %v578 = vpop.permute.xlu0 %577
  %579 = vrot.lane.b32.xlu0 %v573, 17
  %v580 = vpop.permute.xlu0 %579
  %581 = vrot.lane.b32.xlu0 %v574, 17
  %v582 = vpop.permute.xlu0 %581
  %v583 = vsel %vm49, %v580, %v582
  %v584 = vsel %vm49, %v578, %v580
  %v585 = vsel %vm49, %v576, %v578
  %v586 = vsel %vm49, %v582, %v576
  %v587 = vmul.f32 %v586, %v58
  %v588 = vmul.f32 %v585, %v62
  %v589 = vmul.f32 %v584, %v66
  %v590 = vmul.f32 %v583, %v70
  %592 = vset.pattern.permute.xlu0 0
  %593 = vperm.xlu0 %592, %v568
  %v594 = vpop.permute.xlu0 %593
  %v596 = vmul.f32 %v594, %v587
  %v597 = vmul.f32 %v594, %v588
  %v598 = vmul.f32 %v594, %v589
  %v599 = vmul.f32 %v594, %v590
  %600 = vrot.lane.b32.xlu0 %v571, 16
  %v601 = vpop.permute.xlu0 %600
  %602 = vrot.lane.b32.xlu0 %v572, 16
  %v603 = vpop.permute.xlu0 %602
  %604 = vrot.lane.b32.xlu0 %v573, 16
  %v605 = vpop.permute.xlu0 %604
  %606 = vrot.lane.b32.xlu0 %v574, 16
  %v607 = vpop.permute.xlu0 %606
  %v608 = vsel %vm96, %v605, %v607
  %v609 = vsel %vm96, %v603, %v605
  %v610 = vsel %vm96, %v601, %v603
  %v611 = vsel %vm96, %v607, %v601
  %v612 = vmul.f32 %v611, %v105
  %v613 = vmul.f32 %v610, %v109
  %v614 = vmul.f32 %v609, %v113
  %v615 = vmul.f32 %v608, %v117
  %616 = vset.pattern.permute.xlu0 1
  %617 = vperm.xlu0 %616, %v568
  %v618 = vpop.permute.xlu0 %617
  %v620 = vmul.f32 %v618, %v612
  %v621 = vmul.f32 %v618, %v613
  %v622 = vmul.f32 %v618, %v614
  %v623 = vmul.f32 %v618, %v615
  %v624 = vadd.f32 %v596, %v620
  %v625 = vadd.f32 %v597, %v621
  %v626 = vadd.f32 %v598, %v622
  %v627 = vadd.f32 %v599, %v623
  %628 = vrot.lane.b32.xlu0 %v571, 15
  %v629 = vpop.permute.xlu0 %628
  %630 = vrot.lane.b32.xlu0 %v572, 15
  %v631 = vpop.permute.xlu0 %630
  %632 = vrot.lane.b32.xlu0 %v573, 15
  %v633 = vpop.permute.xlu0 %632
  %634 = vrot.lane.b32.xlu0 %v574, 15
  %v635 = vpop.permute.xlu0 %634
  %v636 = vsel %vm146, %v633, %v635
  %v637 = vsel %vm146, %v631, %v633
  %v638 = vsel %vm146, %v629, %v631
  %v639 = vsel %vm146, %v635, %v629
  %v640 = vmul.f32 %v639, %v155
  %v641 = vmul.f32 %v638, %v159
  %v642 = vmul.f32 %v637, %v163
  %v643 = vmul.f32 %v636, %v167
  %644 = vset.pattern.permute.xlu0 2
  %645 = vperm.xlu0 %644, %v568
  %v646 = vpop.permute.xlu0 %645
  %v648 = vmul.f32 %v646, %v640
  %v649 = vmul.f32 %v646, %v641
  %v650 = vmul.f32 %v646, %v642
  %v651 = vmul.f32 %v646, %v643
  %v652 = vadd.f32 %v624, %v648
  %v653 = vadd.f32 %v625, %v649
  %v654 = vadd.f32 %v626, %v650
  %v655 = vadd.f32 %v627, %v651
  %656 = vrot.lane.b32.xlu0 %v571, 1
  %v657 = vpop.permute.xlu0 %656
  %658 = vrot.lane.b32.xlu0 %v572, 1
  %v659 = vpop.permute.xlu0 %658
  %660 = vrot.lane.b32.xlu0 %v573, 1
  %v661 = vpop.permute.xlu0 %660
  %662 = vrot.lane.b32.xlu0 %v574, 1
  %v663 = vpop.permute.xlu0 %662
  %v664 = vsel %vm196, %v661, %v663
  %v665 = vsel %vm196, %v659, %v661
  %v666 = vsel %vm196, %v657, %v659
  %v667 = vsel %vm196, %v663, %v657
  %v668 = vmul.f32 %v667, %v205
  %v669 = vmul.f32 %v666, %v209
  %v670 = vmul.f32 %v665, %v213
  %v671 = vmul.f32 %v664, %v217
  %672 = vset.pattern.permute.xlu0 3
  %673 = vperm.xlu0 %672, %v568
  %v674 = vpop.permute.xlu0 %673
  %v676 = vmul.f32 %v674, %v668
  %v677 = vmul.f32 %v674, %v669
  %v678 = vmul.f32 %v674, %v670
  %v679 = vmul.f32 %v674, %v671
  %v680 = vadd.f32 %v652, %v676
  %v681 = vadd.f32 %v653, %v677
  %v682 = vadd.f32 %v654, %v678
  %v683 = vadd.f32 %v655, %v679
  %684 = vset.pattern.permute.xlu0 4
  %685 = vperm.xlu0 %684, %v568
  %v686 = vpop.permute.xlu0 %685
  %v688 = vmul.f32 %v686, %v571
  %v689 = vmul.f32 %v686, %v572
  %v690 = vmul.f32 %v686, %v573
  %v691 = vmul.f32 %v686, %v574
  %v692 = vadd.f32 %v680, %v688
  %v693 = vadd.f32 %v681, %v689
  %v694 = vadd.f32 %v682, %v690
  %v695 = vadd.f32 %v683, %v691
  %696 = vrot.lane.b32.xlu0 %v571, 127
  %v697 = vpop.permute.xlu0 %696
  %698 = vrot.lane.b32.xlu0 %v572, 127
  %v699 = vpop.permute.xlu0 %698
  %700 = vrot.lane.b32.xlu0 %v573, 127
  %v701 = vpop.permute.xlu0 %700
  %702 = vrot.lane.b32.xlu0 %v574, 127
  %v703 = vpop.permute.xlu0 %702
  %v704 = vsel %vm258, %v701, %v703
  %v705 = vsel %vm258, %v699, %v701
  %v706 = vsel %vm258, %v697, %v699
  %v707 = vsel %vm258, %v703, %v697
  %v708 = vmul.f32 %v706, %v267
  %v709 = vmul.f32 %v705, %v271
  %v710 = vmul.f32 %v704, %v275
  %v711 = vmul.f32 %v707, %v279
  %712 = vset.pattern.permute.xlu0 5
  %713 = vperm.xlu0 %712, %v568
  %v714 = vpop.permute.xlu0 %713
  %v716 = vmul.f32 %v714, %v708
  %v717 = vmul.f32 %v714, %v709
  %v718 = vmul.f32 %v714, %v710
  %v719 = vmul.f32 %v714, %v711
  %v720 = vadd.f32 %v692, %v716
  %v721 = vadd.f32 %v693, %v717
  %v722 = vadd.f32 %v694, %v718
  %v723 = vadd.f32 %v695, %v719
  %724 = vrot.lane.b32.xlu0 %v571, 113
  %v725 = vpop.permute.xlu0 %724
  %726 = vrot.lane.b32.xlu0 %v572, 113
  %v727 = vpop.permute.xlu0 %726
  %728 = vrot.lane.b32.xlu0 %v573, 113
  %v729 = vpop.permute.xlu0 %728
  %730 = vrot.lane.b32.xlu0 %v574, 113
  %v731 = vpop.permute.xlu0 %730
  %v732 = vsel %vm308, %v729, %v731
  %v733 = vsel %vm308, %v727, %v729
  %v734 = vsel %vm308, %v725, %v727
  %v735 = vsel %vm308, %v731, %v725
  %v736 = vmul.f32 %v734, %v317
  %v737 = vmul.f32 %v733, %v321
  %v738 = vmul.f32 %v732, %v325
  %v739 = vmul.f32 %v735, %v329
  %740 = vset.pattern.permute.xlu0 6
  %741 = vperm.xlu0 %740, %v568
  %v742 = vpop.permute.xlu0 %741
  %v744 = vmul.f32 %v742, %v736
  %v745 = vmul.f32 %v742, %v737
  %v746 = vmul.f32 %v742, %v738
  %v747 = vmul.f32 %v742, %v739
  %v748 = vadd.f32 %v720, %v744
  %v749 = vadd.f32 %v721, %v745
  %v750 = vadd.f32 %v722, %v746
  %v751 = vadd.f32 %v723, %v747
  %752 = vrot.lane.b32.xlu0 %v571, 112
  %v753 = vpop.permute.xlu0 %752
  %754 = vrot.lane.b32.xlu0 %v572, 112
  %v755 = vpop.permute.xlu0 %754
  %756 = vrot.lane.b32.xlu0 %v573, 112
  %v757 = vpop.permute.xlu0 %756
  %758 = vrot.lane.b32.xlu0 %v574, 112
  %v759 = vpop.permute.xlu0 %758
  %v760 = vsel %vm358, %v757, %v759
  %v761 = vsel %vm358, %v755, %v757
  %v762 = vsel %vm358, %v753, %v755
  %v763 = vsel %vm358, %v759, %v753
  %v764 = vmul.f32 %v762, %v367
  %v765 = vmul.f32 %v761, %v371
  %v766 = vmul.f32 %v760, %v375
  %v767 = vmul.f32 %v763, %v379
  %768 = vset.pattern.permute.xlu0 7
  %769 = vperm.xlu0 %768, %v568
  %v770 = vpop.permute.xlu0 %769
  %v772 = vmul.f32 %v770, %v764
  %v773 = vmul.f32 %v770, %v765
  %v774 = vmul.f32 %v770, %v766
  %v775 = vmul.f32 %v770, %v767
  %v776 = vadd.f32 %v748, %v772
  %v777 = vadd.f32 %v749, %v773
  %v778 = vadd.f32 %v750, %v774
  %v779 = vadd.f32 %v751, %v775
  %780 = vrot.lane.b32.xlu0 %v571, 111
  %v781 = vpop.permute.xlu0 %780
  %782 = vrot.lane.b32.xlu0 %v572, 111
  %v783 = vpop.permute.xlu0 %782
  %784 = vrot.lane.b32.xlu0 %v573, 111
  %v785 = vpop.permute.xlu0 %784
  %786 = vrot.lane.b32.xlu0 %v574, 111
  %v787 = vpop.permute.xlu0 %786
  %v788 = vsel %vm408, %v785, %v787
  %v789 = vsel %vm408, %v783, %v785
  %v790 = vsel %vm408, %v781, %v783
  %v791 = vsel %vm408, %v787, %v781
  %v792 = vmul.f32 %v790, %v417
  %v793 = vmul.f32 %v789, %v421
  %v794 = vmul.f32 %v788, %v425
  %v795 = vmul.f32 %v791, %v429
  %796 = vset.pattern.permute.xlu0 8
  %797 = vperm.xlu0 %796, %v568
  %v798 = vpop.permute.xlu0 %797
  %v800 = vmul.f32 %v798, %v792
  %v801 = vmul.f32 %v798, %v793
  %v802 = vmul.f32 %v798, %v794
  %v803 = vmul.f32 %v798, %v795
  %v804 = vadd.f32 %v776, %v800
  %v805 = vadd.f32 %v777, %v801
  %v806 = vadd.f32 %v778, %v802
  %v807 = vadd.f32 %v779, %v803
  %809 = vset.pattern.permute.xlu0 0
  %810 = vperm.xlu0 %809, %v569
  %v811 = vpop.permute.xlu0 %810
  %v813 = vlaneseq
  %v814 = vshrl.u32 %v813, 7
  %v815 = vsub.s32 0, %v814
  %v816 = vrot.slane %v804, %v815
  %v817 = vlaneseq
  %v818 = vshrl.u32 %v817, 7
  %v819 = vsub.s32 0, %v818
  %v820 = vrot.slane %v805, %v819
  %v821 = vlaneseq
  %v822 = vshrl.u32 %v821, 7
  %v823 = vsub.s32 0, %v822
  %v824 = vrot.slane %v806, %v823
  %v825 = vlaneseq
  %v826 = vshrl.u32 %v825, 7
  %v827 = vsub.s32 0, %v826
  %v828 = vrot.slane %v807, %v827
  %v829 = vmul.f32 %v811, %v816
  %v830 = vmul.f32 %v811, %v820
  %v831 = vmul.f32 %v811, %v824
  %v832 = vmul.f32 %v811, %v828
  %833 = vset.pattern.permute.xlu0 1
  %834 = vperm.xlu0 %833, %v569
  %v835 = vpop.permute.xlu0 %834
  %v837 = vlaneseq
  %v838 = vshrl.u32 %v837, 7
  %v839 = vsub.s32 1, %v838
  %v840 = vrot.slane %v804, %v839
  %v841 = vlaneseq
  %v842 = vshrl.u32 %v841, 7
  %v843 = vsub.s32 1, %v842
  %v844 = vrot.slane %v805, %v843
  %v845 = vlaneseq
  %v846 = vshrl.u32 %v845, 7
  %v847 = vsub.s32 1, %v846
  %v848 = vrot.slane %v806, %v847
  %v849 = vlaneseq
  %v850 = vshrl.u32 %v849, 7
  %v851 = vsub.s32 1, %v850
  %v852 = vrot.slane %v807, %v851
  %v853 = vmul.f32 %v835, %v840
  %v854 = vmul.f32 %v835, %v844
  %v855 = vmul.f32 %v835, %v848
  %v856 = vmul.f32 %v835, %v852
  %v857 = vadd.f32 %v829, %v853
  %v858 = vadd.f32 %v830, %v854
  %v859 = vadd.f32 %v831, %v855
  %v860 = vadd.f32 %v832, %v856
  %861 = vset.pattern.permute.xlu0 2
  %862 = vperm.xlu0 %861, %v569
  %v863 = vpop.permute.xlu0 %862
  %v865 = vlaneseq
  %v866 = vshrl.u32 %v865, 7
  %v867 = vsub.s32 2, %v866
  %v868 = vrot.slane %v804, %v867
  %v869 = vlaneseq
  %v870 = vshrl.u32 %v869, 7
  %v871 = vsub.s32 2, %v870
  %v872 = vrot.slane %v805, %v871
  %v873 = vlaneseq
  %v874 = vshrl.u32 %v873, 7
  %v875 = vsub.s32 2, %v874
  %v876 = vrot.slane %v806, %v875
  %v877 = vlaneseq
  %v878 = vshrl.u32 %v877, 7
  %v879 = vsub.s32 2, %v878
  %v880 = vrot.slane %v807, %v879
  %v881 = vmul.f32 %v863, %v868
  %v882 = vmul.f32 %v863, %v872
  %v883 = vmul.f32 %v863, %v876
  %v884 = vmul.f32 %v863, %v880
  %v885 = vadd.f32 %v857, %v881
  %v886 = vadd.f32 %v858, %v882
  %v887 = vadd.f32 %v859, %v883
  %v888 = vadd.f32 %v860, %v884
  %889 = vset.pattern.permute.xlu0 3
  %890 = vperm.xlu0 %889, %v569
  %v891 = vpop.permute.xlu0 %890
  %v893 = vlaneseq
  %v894 = vshrl.u32 %v893, 7
  %v895 = vsub.s32 3, %v894
  %v896 = vrot.slane %v804, %v895
  %v897 = vlaneseq
  %v898 = vshrl.u32 %v897, 7
  %v899 = vsub.s32 3, %v898
  %v900 = vrot.slane %v805, %v899
  %v901 = vlaneseq
  %v902 = vshrl.u32 %v901, 7
  %v903 = vsub.s32 3, %v902
  %v904 = vrot.slane %v806, %v903
  %v905 = vlaneseq
  %v906 = vshrl.u32 %v905, 7
  %v907 = vsub.s32 3, %v906
  %v908 = vrot.slane %v807, %v907
  %v909 = vmul.f32 %v891, %v896
  %v910 = vmul.f32 %v891, %v900
  %v911 = vmul.f32 %v891, %v904
  %v912 = vmul.f32 %v891, %v908
  %v913 = vadd.f32 %v885, %v909
  %v914 = vadd.f32 %v886, %v910
  %v915 = vadd.f32 %v887, %v911
  %v916 = vadd.f32 %v888, %v912
  %917 = vset.pattern.permute.xlu0 4
  %918 = vperm.xlu0 %917, %v569
  %v919 = vpop.permute.xlu0 %918
  %v921 = vlaneseq
  %v922 = vshrl.u32 %v921, 7
  %v923 = vsub.s32 4, %v922
  %v924 = vrot.slane %v804, %v923
  %v925 = vlaneseq
  %v926 = vshrl.u32 %v925, 7
  %v927 = vsub.s32 4, %v926
  %v928 = vrot.slane %v805, %v927
  %v929 = vlaneseq
  %v930 = vshrl.u32 %v929, 7
  %v931 = vsub.s32 4, %v930
  %v932 = vrot.slane %v806, %v931
  %v933 = vlaneseq
  %v934 = vshrl.u32 %v933, 7
  %v935 = vsub.s32 4, %v934
  %v936 = vrot.slane %v807, %v935
  %v937 = vmul.f32 %v919, %v924
  %v938 = vmul.f32 %v919, %v928
  %v939 = vmul.f32 %v919, %v932
  %v940 = vmul.f32 %v919, %v936
  %v941 = vadd.f32 %v913, %v937
  %v942 = vadd.f32 %v914, %v938
  %v943 = vadd.f32 %v915, %v939
  %v944 = vadd.f32 %v916, %v940
  %945 = vset.pattern.permute.xlu0 5
  %946 = vperm.xlu0 %945, %v569
  %v947 = vpop.permute.xlu0 %946
  %v949 = vlaneseq
  %v950 = vshrl.u32 %v949, 7
  %v951 = vsub.s32 5, %v950
  %v952 = vrot.slane %v804, %v951
  %v953 = vlaneseq
  %v954 = vshrl.u32 %v953, 7
  %v955 = vsub.s32 5, %v954
  %v956 = vrot.slane %v805, %v955
  %v957 = vlaneseq
  %v958 = vshrl.u32 %v957, 7
  %v959 = vsub.s32 5, %v958
  %v960 = vrot.slane %v806, %v959
  %v961 = vlaneseq
  %v962 = vshrl.u32 %v961, 7
  %v963 = vsub.s32 5, %v962
  %v964 = vrot.slane %v807, %v963
  %v965 = vmul.f32 %v947, %v952
  %v966 = vmul.f32 %v947, %v956
  %v967 = vmul.f32 %v947, %v960
  %v968 = vmul.f32 %v947, %v964
  %v969 = vadd.f32 %v941, %v965
  %v970 = vadd.f32 %v942, %v966
  %v971 = vadd.f32 %v943, %v967
  %v972 = vadd.f32 %v944, %v968
  %973 = vset.pattern.permute.xlu0 6
  %974 = vperm.xlu0 %973, %v569
  %v975 = vpop.permute.xlu0 %974
  %v977 = vlaneseq
  %v978 = vshrl.u32 %v977, 7
  %v979 = vsub.s32 6, %v978
  %v980 = vrot.slane %v804, %v979
  %v981 = vlaneseq
  %v982 = vshrl.u32 %v981, 7
  %v983 = vsub.s32 6, %v982
  %v984 = vrot.slane %v805, %v983
  %v985 = vlaneseq
  %v986 = vshrl.u32 %v985, 7
  %v987 = vsub.s32 6, %v986
  %v988 = vrot.slane %v806, %v987
  %v989 = vlaneseq
  %v990 = vshrl.u32 %v989, 7
  %v991 = vsub.s32 6, %v990
  %v992 = vrot.slane %v807, %v991
  %v993 = vmul.f32 %v975, %v980
  %v994 = vmul.f32 %v975, %v984
  %v995 = vmul.f32 %v975, %v988
  %v996 = vmul.f32 %v975, %v992
  %v997 = vadd.f32 %v969, %v993
  %v998 = vadd.f32 %v970, %v994
  %v999 = vadd.f32 %v971, %v995
  %v1000 = vadd.f32 %v972, %v996
  %1001 = vset.pattern.permute.xlu0 7
  %1002 = vperm.xlu0 %1001, %v569
  %v1003 = vpop.permute.xlu0 %1002
  %v1005 = vlaneseq
  %v1006 = vshrl.u32 %v1005, 7
  %v1007 = vsub.s32 7, %v1006
  %v1008 = vrot.slane %v804, %v1007
  %v1009 = vlaneseq
  %v1010 = vshrl.u32 %v1009, 7
  %v1011 = vsub.s32 7, %v1010
  %v1012 = vrot.slane %v805, %v1011
  %v1013 = vlaneseq
  %v1014 = vshrl.u32 %v1013, 7
  %v1015 = vsub.s32 7, %v1014
  %v1016 = vrot.slane %v806, %v1015
  %v1017 = vlaneseq
  %v1018 = vshrl.u32 %v1017, 7
  %v1019 = vsub.s32 7, %v1018
  %v1020 = vrot.slane %v807, %v1019
  %v1021 = vmul.f32 %v1003, %v1008
  %v1022 = vmul.f32 %v1003, %v1012
  %v1023 = vmul.f32 %v1003, %v1016
  %v1024 = vmul.f32 %v1003, %v1020
  %v1025 = vadd.f32 %v997, %v1021
  %v1026 = vadd.f32 %v998, %v1022
  %v1027 = vadd.f32 %v999, %v1023
  %v1028 = vadd.f32 %v1000, %v1024
  %1030 = vset.pattern.permute.xlu0 0
  %1031 = vperm.xlu0 %1030, %v570
  %v1032 = vpop.permute.xlu0 %1031
  %v1034 = vadd.f32 %v1025, %v1032
  %v1035 = vadd.f32 %v1026, %v1032
  %v1036 = vadd.f32 %v1027, %v1032
  %v1037 = vadd.f32 %v1028, %v1032
  %v1038 = vld [vmem:[%s1 + $0x100] sm:$0xff]
  %v1039 = vld [vmem:[%s1 + $0x120] sm:$0xff]
  %1041 = vset.pattern.permute.xlu0 0
  %1042 = vperm.xlu0 %1041, %v1038
  %v1043 = vpop.permute.xlu0 %1042
  %v1047 = vlaneseq
  %v1048 = vshrl.u32 %v1047, 7
  %v1049 = vsub.s32 0, %v1048
  %v1050 = vrot.slane %v11, %v1049
  %v1051 = vlaneseq
  %v1052 = vshrl.u32 %v1051, 7
  %v1053 = vsub.s32 4, %v1052
  %v1054 = vrot.slane %v11, %v1053
  %v1055 = vlaneseq
  %v1056 = vshrl.u32 %v1055, 7
  %v1057 = vsub.s32 0, %v1056
  %v1058 = vrot.slane %v12, %v1057
  %v1059 = vlaneseq
  %v1060 = vshrl.u32 %v1059, 7
  %v1061 = vsub.s32 4, %v1060
  %v1062 = vrot.slane %v12, %v1061
  %v1067 = vlaneseq
  %v1068 = vshrl.u32 %v1067, 7
  %v1069 = vsub.s32 0, %v1068
  %v1070 = vrot.slane %v1050, %v1069
  %v1071 = vlaneseq
  %v1072 = vshrl.u32 %v1071, 7
  %v1073 = vsub.s32 0, %v1072
  %v1074 = vrot.slane %v1054, %v1073
  %v1075 = vlaneseq
  %v1076 = vshrl.u32 %v1075, 7
  %v1077 = vsub.s32 0, %v1076
  %v1078 = vrot.slane %v1058, %v1077
  %v1079 = vlaneseq
  %v1080 = vshrl.u32 %v1079, 7
  %v1081 = vsub.s32 0, %v1080
  %v1082 = vrot.slane %v1062, %v1081
  %v1083 = vmul.f32 %v1043, %v1070
  %v1084 = vmul.f32 %v1043, %v1074
  %v1085 = vmul.f32 %v1043, %v1078
  %v1086 = vmul.f32 %v1043, %v1082
  %1087 = vset.pattern.permute.xlu0 1
  %1088 = vperm.xlu0 %1087, %v1038
  %v1089 = vpop.permute.xlu0 %1088
  %v1091 = vlaneseq
  %v1092 = vshrl.u32 %v1091, 7
  %v1093 = vsub.s32 1, %v1092
  %v1094 = vrot.slane %v11, %v1093
  %v1095 = vlaneseq
  %v1096 = vshrl.u32 %v1095, 7
  %v1097 = vsub.s32 5, %v1096
  %v1098 = vrot.slane %v11, %v1097
  %v1099 = vlaneseq
  %v1100 = vshrl.u32 %v1099, 7
  %v1101 = vsub.s32 1, %v1100
  %v1102 = vrot.slane %v12, %v1101
  %v1103 = vlaneseq
  %v1104 = vshrl.u32 %v1103, 7
  %v1105 = vsub.s32 5, %v1104
  %v1106 = vrot.slane %v12, %v1105
  %v1111 = vlaneseq
  %v1112 = vshrl.u32 %v1111, 7
  %v1113 = vsub.s32 1, %v1112
  %v1114 = vrot.slane %v1094, %v1113
  %v1115 = vlaneseq
  %v1116 = vshrl.u32 %v1115, 7
  %v1117 = vsub.s32 1, %v1116
  %v1118 = vrot.slane %v1098, %v1117
  %v1119 = vlaneseq
  %v1120 = vshrl.u32 %v1119, 7
  %v1121 = vsub.s32 1, %v1120
  %v1122 = vrot.slane %v1102, %v1121
  %v1123 = vlaneseq
  %v1124 = vshrl.u32 %v1123, 7
  %v1125 = vsub.s32 1, %v1124
  %v1126 = vrot.slane %v1106, %v1125
  %v1127 = vmul.f32 %v1089, %v1114
  %v1128 = vmul.f32 %v1089, %v1118
  %v1129 = vmul.f32 %v1089, %v1122
  %v1130 = vmul.f32 %v1089, %v1126
  %v1131 = vadd.f32 %v1083, %v1127
  %v1132 = vadd.f32 %v1084, %v1128
  %v1133 = vadd.f32 %v1085, %v1129
  %v1134 = vadd.f32 %v1086, %v1130
  %1135 = vset.pattern.permute.xlu0 2
  %1136 = vperm.xlu0 %1135, %v1038
  %v1137 = vpop.permute.xlu0 %1136
  %v1139 = vlaneseq
  %v1140 = vshrl.u32 %v1139, 7
  %v1141 = vsub.s32 2, %v1140
  %v1142 = vrot.slane %v11, %v1141
  %v1143 = vlaneseq
  %v1144 = vshrl.u32 %v1143, 7
  %v1145 = vsub.s32 6, %v1144
  %v1146 = vrot.slane %v11, %v1145
  %v1147 = vlaneseq
  %v1148 = vshrl.u32 %v1147, 7
  %v1149 = vsub.s32 2, %v1148
  %v1150 = vrot.slane %v12, %v1149
  %v1151 = vlaneseq
  %v1152 = vshrl.u32 %v1151, 7
  %v1153 = vsub.s32 6, %v1152
  %v1154 = vrot.slane %v12, %v1153
  %v1159 = vlaneseq
  %v1160 = vshrl.u32 %v1159, 7
  %v1161 = vsub.s32 2, %v1160
  %v1162 = vrot.slane %v1142, %v1161
  %v1163 = vlaneseq
  %v1164 = vshrl.u32 %v1163, 7
  %v1165 = vsub.s32 2, %v1164
  %v1166 = vrot.slane %v1146, %v1165
  %v1167 = vlaneseq
  %v1168 = vshrl.u32 %v1167, 7
  %v1169 = vsub.s32 2, %v1168
  %v1170 = vrot.slane %v1150, %v1169
  %v1171 = vlaneseq
  %v1172 = vshrl.u32 %v1171, 7
  %v1173 = vsub.s32 2, %v1172
  %v1174 = vrot.slane %v1154, %v1173
  %v1175 = vmul.f32 %v1137, %v1162
  %v1176 = vmul.f32 %v1137, %v1166
  %v1177 = vmul.f32 %v1137, %v1170
  %v1178 = vmul.f32 %v1137, %v1174
  %v1179 = vadd.f32 %v1131, %v1175
  %v1180 = vadd.f32 %v1132, %v1176
  %v1181 = vadd.f32 %v1133, %v1177
  %v1182 = vadd.f32 %v1134, %v1178
  %1183 = vset.pattern.permute.xlu0 3
  %1184 = vperm.xlu0 %1183, %v1038
  %v1185 = vpop.permute.xlu0 %1184
  %v1187 = vlaneseq
  %v1188 = vshrl.u32 %v1187, 7
  %v1189 = vsub.s32 3, %v1188
  %v1190 = vrot.slane %v11, %v1189
  %v1191 = vlaneseq
  %v1192 = vshrl.u32 %v1191, 7
  %v1193 = vsub.s32 7, %v1192
  %v1194 = vrot.slane %v11, %v1193
  %v1195 = vlaneseq
  %v1196 = vshrl.u32 %v1195, 7
  %v1197 = vsub.s32 3, %v1196
  %v1198 = vrot.slane %v12, %v1197
  %v1199 = vlaneseq
  %v1200 = vshrl.u32 %v1199, 7
  %v1201 = vsub.s32 7, %v1200
  %v1202 = vrot.slane %v12, %v1201
  %v1207 = vlaneseq
  %v1208 = vshrl.u32 %v1207, 7
  %v1209 = vsub.s32 3, %v1208
  %v1210 = vrot.slane %v1190, %v1209
  %v1211 = vlaneseq
  %v1212 = vshrl.u32 %v1211, 7
  %v1213 = vsub.s32 3, %v1212
  %v1214 = vrot.slane %v1194, %v1213
  %v1215 = vlaneseq
  %v1216 = vshrl.u32 %v1215, 7
  %v1217 = vsub.s32 3, %v1216
  %v1218 = vrot.slane %v1198, %v1217
  %v1219 = vlaneseq
  %v1220 = vshrl.u32 %v1219, 7
  %v1221 = vsub.s32 3, %v1220
  %v1222 = vrot.slane %v1202, %v1221
  %v1223 = vmul.f32 %v1185, %v1210
  %v1224 = vmul.f32 %v1185, %v1214
  %v1225 = vmul.f32 %v1185, %v1218
  %v1226 = vmul.f32 %v1185, %v1222
  %v1227 = vadd.f32 %v1179, %v1223
  %v1228 = vadd.f32 %v1180, %v1224
  %v1229 = vadd.f32 %v1181, %v1225
  %v1230 = vadd.f32 %v1182, %v1226
  %1232 = vset.pattern.permute.xlu0 0
  %1233 = vperm.xlu0 %1232, %v1039
  %v1234 = vpop.permute.xlu0 %1233
  %v1236 = vadd.f32 %v1227, %v1234
  %v1237 = vadd.f32 %v1228, %v1234
  %v1238 = vadd.f32 %v1229, %v1234
  %v1239 = vadd.f32 %v1230, %v1234
  %v1240 = vadd.f32 %v1034, %v1236
  %v1241 = vadd.f32 %v1035, %v1237
  %v1242 = vadd.f32 %v1036, %v1238
  %v1243 = vadd.f32 %v1037, %v1239
  %1244 = vst [vmem:[%s2] sm:$0xff] %v1240
  %1245 = vst [vmem:[%s2 + $0x8] sm:$0xff] %v1241
  %1246 = vst [vmem:[%s2 + $0x10] sm:$0xff] %v1242
  %1247 = vst [vmem:[%s2 + $0x18] sm:$0xff] %v1243
  // Predicated region
  $region10: #{block_forward.1} parent=0 // pred_check
    _
  $region11: #{block_forward.1} parent=0 // pred_check_branch
    %1249 = sbr.rel (0) target = $region13
  $region12: #{block_forward.1} parent=0 // pred_region
    _
  $region13: #{block_forward.1} parent=0 // pred_fallthru
    _
  // Predicated region
  $region14: #{block_forward.1} parent=0 // pred_check
    _
  $region15: #{block_forward.1} parent=0 // pred_check_branch
    %1251 = sbr.rel (0) target = $region17
  $region16: #{block_forward.1} parent=0 // pred_region
    _
  $region17: #{block_forward.1} parent=0 // pred_fallthru
    _

</llo_original>
